<compile_context>
chip_gen: v7x
topology: tpu7x:2x2x1
jax: 0.10.0
libtpu: 0.0.40
codegen_flags: <defaults>
</compile_context>

<pallas_src>
import jax
import jax.numpy as jnp
import numpy as np
from jax.experimental import pallas as pl
from jax.experimental.pallas import tpu as pltpu


# ----------------------------- Pallas kernel ---------------------------------

def _emotion_fused_kernel(x_ref, b_ref, she_ref, sho_ref, wfc_ref, o_ref):
    """grid = (channel_group, batch).  One step: conv+ReLU+pool+FC-partial for a group.

    x_ref:   (1, 3*(W+3), H)  kh-concatenated, transposed, zero-padded plane
                              (each (W+3)-row slab also carries a trailing ones row)
    b_ref:   (1, R2, 3*(W+3)) banded conv weights, kh folded into columns
                              (column W+2 of the kh=0 slab = bias)
    she/sho: (H, Hp)          one-hot even/odd H-pool selectors
    wfc_ref: (1, K, R1, Hp)   fc1 weights permuted to the pooled layout
    o_ref:   (1, 1, 1, K)     partial logits for this (sample, group)
    """
    K = wfc_ref.shape[1]
    r1 = wfc_ref.shape[2]

    # 3x3 conv (PyTorch cross-correlation) + bias: ONE MXU matmul for the whole group.
    conv = jnp.dot(b_ref[0], x_ref[0], preferred_element_type=jnp.float32)   # (R2, H)
    act = jnp.maximum(conv, 0.0)                                             # ReLU

    # MaxPool2d(2,2): H (lanes) via even/odd selection matmuls, W via row-half max.
    rh = jnp.maximum(
        jnp.dot(act, she_ref[...], preferred_element_type=jnp.float32),
        jnp.dot(act, sho_ref[...], preferred_element_type=jnp.float32))      # (R2, Hp)
    pooled = jnp.maximum(rh[:r1, :], rh[r1:, :])                             # (R1, Hp)

    # Fused Linear: per-class Frobenius product with the permuted weight slice.
    parts = []
    for k in range(K):
        prod = pooled * wfc_ref[0, k]                                        # (R1, Hp)
        parts.append(jnp.sum(jnp.sum(prod, axis=1, keepdims=True),
                             axis=0, keepdims=True))                         # (1, 1)
    o_ref[0, 0] = jnp.concatenate(parts, axis=1)                             # (1, K)


# ------------------------------- wrapper --------------------------------------

def emotion_model_forward(x, params, *, groups=2):
    """x: (N, 1, H, W) f32 -> logits (N, num_classes) f32."""
    w_conv = params["w_conv"].astype(jnp.float32)          # (C, 1, 3, 3)
    b_conv = params["b_conv"].astype(jnp.float32)          # (C,)
    w_fc = params["w_fc"].astype(jnp.float32)              # (K, F)
    b_fc = params["b_fc"].astype(jnp.float32)              # (K,)

    N, _, H, W = x.shape
    C = w_conv.shape[0]
    K = w_fc.shape[0]
    G = groups
    assert C % G == 0 and H % 2 == 0 and W >= 2
    Cg = C // G
    Hp, Wp = H // 2, W // 2
    R1 = Cg * Wp            # rows of one group's pooled tile (channel-major, then j)
    R2 = 2 * R1             # conv rows: [even-w rows | odd-w rows]
    Wc = W + 3              # padded-W rows per kh slab (incl. the all-ones bias row)

    # Input: transposed (W, H) planes so the long H axis sits on lanes; zero pad;
    # append an all-ones row (pairs with the bias column); then concatenate the three
    # kh-shifted H-slices along the sublane axis -> one matmul operand per sample.
    xt = jnp.transpose(x[:, 0, :, :].astype(jnp.float32), (0, 2, 1))     # (N, W, H)
    xt = jnp.pad(xt, ((0, 0), (1, 1), (1, 1)))                           # (N, W+2, H+2)
    xt = jnp.concatenate([xt, jnp.ones((N, 1, H + 2), jnp.float32)], axis=1)  # (N, Wc, H+2)
    xcat = jnp.concatenate([xt[:, :, 0:H], xt[:, :, 1:1 + H], xt[:, :, 2:2 + H]],
                           axis=1)                                       # (N, 3*Wc, H)

    # Banded conv weights: B[g, kh, half*Cg*Wp + cl*Wp + j, (2j+half)+kw] = w[c,0,kh,kw],
    # then kh folded into the column axis -> (G, R2, 3*Wc).
    taps = w_conv[:, 0, :, :]                                            # (C, 3, 3)
    m = np.zeros((3, 2, Wp, Wc), np.float32)
    for kw in range(3):
        for half in range(2):
            for j in range(Wp):
                m[kw, half, j, 2 * j + half + kw] = 1.0
    bmat = jnp.einsum("cab,bhjq->cahjq", taps, jnp.asarray(m),
                      precision=jax.lax.Precision.HIGHEST)               # (C,3,2,Wp,Wc)
    bmat = bmat.reshape(G, Cg, 3, 2, Wp, Wc).transpose(0, 2, 3, 1, 4, 5)
    bmat = bmat.reshape(G, 3, R2, Wc)
    bias_rows = jnp.broadcast_to(b_conv[:, None, None], (C, 2, Wp))
    bias_rows = bias_rows.reshape(G, Cg, 2, Wp).transpose(0, 2, 1, 3).reshape(G, R2)
    bmat = bmat.at[:, 0, :, W + 2].set(bias_rows)        # bias rides in the kh=0 slab
    bmat = bmat.transpose(0, 2, 1, 3).reshape(G, R2, 3 * Wc)             # (G, R2, 3*Wc)

    # One-hot H-pool selectors (H on lanes -> even/odd column selection).
    she = np.zeros((H, Hp), np.float32)
    sho = np.zeros((H, Hp), np.float32)
    she[2 * np.arange(Hp), np.arange(Hp)] = 1.0
    sho[2 * np.arange(Hp) + 1, np.arange(Hp)] = 1.0

    # fc1 weight permuted to the kernel's pooled layout: wz[g, k, cl*Wp+j, i].
    wz = w_fc.reshape(K, C, Hp, Wp).transpose(1, 0, 3, 2)                # (C, K, Wp, Hp)
    wz = wz.reshape(G, Cg, K, Wp, Hp).transpose(0, 2, 1, 3, 4).reshape(G, K, R1, Hp)

    partials = pl.pallas_call(
        _emotion_fused_kernel,
        out_shape=jax.ShapeDtypeStruct((N, G, 1, K), jnp.float32),
        grid=(G, N),                           # group slow -> weights stay VMEM-resident
        in_specs=[
            pl.BlockSpec((1, 3 * Wc, H), lambda g, n: (n, 0, 0)),        # input slab
            pl.BlockSpec((1, R2, 3 * Wc), lambda g, n: (g, 0, 0)),       # banded conv w
            pl.BlockSpec((H, Hp), lambda g, n: (0, 0)),                  # even selector
            pl.BlockSpec((H, Hp), lambda g, n: (0, 0)),                  # odd selector
            pl.BlockSpec((1, K, R1, Hp), lambda g, n: (g, 0, 0, 0)),     # fc1 weights
        ],
        out_specs=pl.BlockSpec((1, 1, 1, K), lambda g, n: (n, g, 0, 0)),
        compiler_params=pltpu.CompilerParams(
            dimension_semantics=("parallel", "parallel")),
    )(xcat, bmat, jnp.asarray(she), jnp.asarray(sho), wz)

    return partials.reshape(N, G, K).sum(axis=1) + b_fc[None, :]


# ------------------------------ reference -------------------------------------

def reference_forward(x, params):
    hi = jax.lax.Precision.HIGHEST
    conv = jax.lax.conv_general_dilated(
        x.astype(jnp.float32), params["w_conv"].astype(jnp.float32),
        window_strides=(1, 1), padding=((1, 1), (1, 1)),
        dimension_numbers=("NCHW", "OIHW", "NCHW"), precision=hi)
    act = jnp.maximum(conv + params["b_conv"][None, :, None, None], 0.0)
    pooled = jax.lax.reduce_window(act, -jnp.inf, jax.lax.max,
                                   (1, 1, 2, 2), (1, 1, 2, 2), "VALID")
    flat = pooled.reshape(x.shape[0], -1)
    return jnp.dot(flat, params["w_fc"].T, precision=hi) + params["b_fc"]


# --------------------------------- main ----------------------------------------

if __name__ == "__main__":
    N, H, W = 2, 16, 15          # small stand-in for the (1, 1, 128, 73) spectrograms
    num_classes = 7
    C_out = 32
    F = C_out * (H // 2) * (W // 2)   # == EmotionModel.flattened_size for this H, W

    key = jax.random.PRNGKey(0)
    k1, k2, k3, k4, kx = jax.random.split(key, 5)
    params = {
        "w_conv": 0.1 * jax.random.normal(k1, (C_out, 1, 3, 3), jnp.float32),
        "b_conv": 0.1 * jax.random.normal(k2, (C_out,), jnp.float32),
        "w_fc": 0.01 * jax.random.normal(k3, (num_classes, F), jnp.float32),
        "b_fc": 0.01 * jax.random.normal(k4, (num_classes,), jnp.float32),
    }
    x = jax.random.normal(kx, (N, 1, H, W), jnp.float32)

    fwd = jax.jit(emotion_model_forward)
    out = jax.block_until_ready(fwd(x, params))

    ref = reference_forward(x, params)
    np.testing.assert_allclose(np.asarray(out), np.asarray(ref), rtol=2e-3, atol=2e-3)
    print("KERNEL_OK")
</pallas_src>

<mosaic_0001>
module attributes {stable_mosaic.version = 11 : i64} {
  func.func @_emotion_fused_kernel(%arg0: i32, %arg1: i32, %arg2: memref<1x54x16xf32, #tpu.memory_space<vmem>>, %arg3: memref<1x224x54xf32, #tpu.memory_space<vmem>>, %arg4: memref<16x8xf32, #tpu.memory_space<vmem>>, %arg5: memref<16x8xf32, #tpu.memory_space<vmem>>, %arg6: memref<1x7x112x8xf32, #tpu.memory_space<vmem>>, %arg7: memref<1x1x1x7xf32, #tpu.memory_space<vmem>>) attributes {dimension_semantics = [#tpu.dimension_semantics<parallel>, #tpu.dimension_semantics<parallel>], iteration_bounds = array<i64: 2, 2>, scalar_prefetch = 0 : i64, scratch_operands = 0 : i64, tpu.core_type = #tpu.core_type<tc>, window_params = [{transform_indices = @transform_0, window_bounds = array<i64: 1, 54, 16>}, {transform_indices = @transform_1, window_bounds = array<i64: 1, 224, 54>}, {pipeline_mode = #tpu.pipeline_mode<synchronous>, transform_indices = @transform_2, window_bounds = array<i64: 16, 8>}, {pipeline_mode = #tpu.pipeline_mode<synchronous>, transform_indices = @transform_3, window_bounds = array<i64: 16, 8>}, {transform_indices = @transform_4, window_bounds = array<i64: 1, 7, 112, 8>}, {transform_indices = @transform_5, window_bounds = array<i64: 1, 1, 1, 7>}]} {
    %c0 = arith.constant 0 : index
    %c0_0 = arith.constant 0 : index
    %c0_1 = arith.constant 0 : index
    %0 = vector.load %arg3[%c0, %c0_0, %c0_1] : memref<1x224x54xf32, #tpu.memory_space<vmem>>, vector<1x224x54xf32>
    %1 = vector.shape_cast %0 : vector<1x224x54xf32> to vector<224x54xf32>
    %c0_2 = arith.constant 0 : index
    %c0_3 = arith.constant 0 : index
    %c0_4 = arith.constant 0 : index
    %2 = vector.load %arg2[%c0_2, %c0_3, %c0_4] : memref<1x54x16xf32, #tpu.memory_space<vmem>>, vector<1x54x16xf32>
    %3 = vector.shape_cast %2 : vector<1x54x16xf32> to vector<54x16xf32>
    %cst = arith.constant dense<0.000000e+00> : vector<224x16xf32>
    %4 = tpu.matmul %1, %3, %cst {dimension_numbers = #tpu.dot_dimension_numbers<[1], [0], [0], [1], [0, 0, 1, 1], [], []>} : vector<224x54xf32>, vector<54x16xf32>, vector<224x16xf32> -> vector<224x16xf32>
    %cst_5 = arith.constant 0.000000e+00 : f32
    %5 = vector.broadcast %cst_5 : f32 to vector<224x16xf32>
    %6 = arith.maximumf %4, %5 : vector<224x16xf32>
    %c0_6 = arith.constant 0 : index
    %c0_7 = arith.constant 0 : index
    %7 = vector.load %arg4[%c0_6, %c0_7] : memref<16x8xf32, #tpu.memory_space<vmem>>, vector<16x8xf32>
    %cst_8 = arith.constant dense<0.000000e+00> : vector<224x8xf32>
    %8 = tpu.matmul %6, %7, %cst_8 {dimension_numbers = #tpu.dot_dimension_numbers<[1], [0], [0], [1], [0, 0, 1, 1], [], []>} : vector<224x16xf32>, vector<16x8xf32>, vector<224x8xf32> -> vector<224x8xf32>
    %c0_9 = arith.constant 0 : index
    %c0_10 = arith.constant 0 : index
    %9 = vector.load %arg5[%c0_9, %c0_10] : memref<16x8xf32, #tpu.memory_space<vmem>>, vector<16x8xf32>
    %cst_11 = arith.constant dense<0.000000e+00> : vector<224x8xf32>
    %10 = tpu.matmul %6, %9, %cst_11 {dimension_numbers = #tpu.dot_dimension_numbers<[1], [0], [0], [1], [0, 0, 1, 1], [], []>} : vector<224x16xf32>, vector<16x8xf32>, vector<224x8xf32> -> vector<224x8xf32>
    %11 = arith.maximumf %8, %10 : vector<224x8xf32>
    %12 = vector.extract_strided_slice %11 {offsets = [0, 0], sizes = [112, 8], strides = [1, 1]} : vector<224x8xf32> to vector<112x8xf32>
    %13 = vector.extract_strided_slice %11 {offsets = [112, 0], sizes = [112, 8], strides = [1, 1]} : vector<224x8xf32> to vector<112x8xf32>
    %14 = arith.maximumf %12, %13 : vector<112x8xf32>
    %c0_12 = arith.constant 0 : index
    %c0_13 = arith.constant 0 : index
    %c0_14 = arith.constant 0 : index
    %c0_15 = arith.constant 0 : index
    %15 = vector.load %arg6[%c0_12, %c0_13, %c0_14, %c0_15] : memref<1x7x112x8xf32, #tpu.memory_space<vmem>>, vector<1x1x112x8xf32>
    %16 = vector.shape_cast %15 : vector<1x1x112x8xf32> to vector<112x8xf32>
    %17 = arith.mulf %14, %16 : vector<112x8xf32>
    %cst_16 = arith.constant dense<0.000000e+00> : vector<112xf32>
    %18 = vector.multi_reduction <add>, %17, %cst_16 [1] : vector<112x8xf32> to vector<112xf32>
    %19 = vector.shape_cast %18 : vector<112xf32> to vector<112x1xf32>
    %cst_17 = arith.constant dense<0.000000e+00> : vector<1xf32>
    %20 = vector.multi_reduction <add>, %19, %cst_17 [0] : vector<112x1xf32> to vector<1xf32>
    %21 = vector.shape_cast %20 : vector<1xf32> to vector<1x1xf32>
    %c0_18 = arith.constant 0 : index
    %c1 = arith.constant 1 : index
    %c0_19 = arith.constant 0 : index
    %c0_20 = arith.constant 0 : index
    %22 = vector.load %arg6[%c0_18, %c1, %c0_19, %c0_20] : memref<1x7x112x8xf32, #tpu.memory_space<vmem>>, vector<1x1x112x8xf32>
    %23 = vector.shape_cast %22 : vector<1x1x112x8xf32> to vector<112x8xf32>
    %24 = arith.mulf %14, %23 : vector<112x8xf32>
    %cst_21 = arith.constant dense<0.000000e+00> : vector<112xf32>
    %25 = vector.multi_reduction <add>, %24, %cst_21 [1] : vector<112x8xf32> to vector<112xf32>
    %26 = vector.shape_cast %25 : vector<112xf32> to vector<112x1xf32>
    %cst_22 = arith.constant dense<0.000000e+00> : vector<1xf32>
    %27 = vector.multi_reduction <add>, %26, %cst_22 [0] : vector<112x1xf32> to vector<1xf32>
    %28 = vector.shape_cast %27 : vector<1xf32> to vector<1x1xf32>
    %c0_23 = arith.constant 0 : index
    %c2 = arith.constant 2 : index
    %c0_24 = arith.constant 0 : index
    %c0_25 = arith.constant 0 : index
    %29 = vector.load %arg6[%c0_23, %c2, %c0_24, %c0_25] : memref<1x7x112x8xf32, #tpu.memory_space<vmem>>, vector<1x1x112x8xf32>
    %30 = vector.shape_cast %29 : vector<1x1x112x8xf32> to vector<112x8xf32>
    %31 = arith.mulf %14, %30 : vector<112x8xf32>
    %cst_26 = arith.constant dense<0.000000e+00> : vector<112xf32>
    %32 = vector.multi_reduction <add>, %31, %cst_26 [1] : vector<112x8xf32> to vector<112xf32>
    %33 = vector.shape_cast %32 : vector<112xf32> to vector<112x1xf32>
    %cst_27 = arith.constant dense<0.000000e+00> : vector<1xf32>
    %34 = vector.multi_reduction <add>, %33, %cst_27 [0] : vector<112x1xf32> to vector<1xf32>
    %35 = vector.shape_cast %34 : vector<1xf32> to vector<1x1xf32>
    %c0_28 = arith.constant 0 : index
    %c3 = arith.constant 3 : index
    %c0_29 = arith.constant 0 : index
    %c0_30 = arith.constant 0 : index
    %36 = vector.load %arg6[%c0_28, %c3, %c0_29, %c0_30] : memref<1x7x112x8xf32, #tpu.memory_space<vmem>>, vector<1x1x112x8xf32>
    %37 = vector.shape_cast %36 : vector<1x1x112x8xf32> to vector<112x8xf32>
    %38 = arith.mulf %14, %37 : vector<112x8xf32>
    %cst_31 = arith.constant dense<0.000000e+00> : vector<112xf32>
    %39 = vector.multi_reduction <add>, %38, %cst_31 [1] : vector<112x8xf32> to vector<112xf32>
    %40 = vector.shape_cast %39 : vector<112xf32> to vector<112x1xf32>
    %cst_32 = arith.constant dense<0.000000e+00> : vector<1xf32>
    %41 = vector.multi_reduction <add>, %40, %cst_32 [0] : vector<112x1xf32> to vector<1xf32>
    %42 = vector.shape_cast %41 : vector<1xf32> to vector<1x1xf32>
    %c0_33 = arith.constant 0 : index
    %c4 = arith.constant 4 : index
    %c0_34 = arith.constant 0 : index
    %c0_35 = arith.constant 0 : index
    %43 = vector.load %arg6[%c0_33, %c4, %c0_34, %c0_35] : memref<1x7x112x8xf32, #tpu.memory_space<vmem>>, vector<1x1x112x8xf32>
    %44 = vector.shape_cast %43 : vector<1x1x112x8xf32> to vector<112x8xf32>
    %45 = arith.mulf %14, %44 : vector<112x8xf32>
    %cst_36 = arith.constant dense<0.000000e+00> : vector<112xf32>
    %46 = vector.multi_reduction <add>, %45, %cst_36 [1] : vector<112x8xf32> to vector<112xf32>
    %47 = vector.shape_cast %46 : vector<112xf32> to vector<112x1xf32>
    %cst_37 = arith.constant dense<0.000000e+00> : vector<1xf32>
    %48 = vector.multi_reduction <add>, %47, %cst_37 [0] : vector<112x1xf32> to vector<1xf32>
    %49 = vector.shape_cast %48 : vector<1xf32> to vector<1x1xf32>
    %c0_38 = arith.constant 0 : index
    %c5 = arith.constant 5 : index
    %c0_39 = arith.constant 0 : index
    %c0_40 = arith.constant 0 : index
    %50 = vector.load %arg6[%c0_38, %c5, %c0_39, %c0_40] : memref<1x7x112x8xf32, #tpu.memory_space<vmem>>, vector<1x1x112x8xf32>
    %51 = vector.shape_cast %50 : vector<1x1x112x8xf32> to vector<112x8xf32>
    %52 = arith.mulf %14, %51 : vector<112x8xf32>
    %cst_41 = arith.constant dense<0.000000e+00> : vector<112xf32>
    %53 = vector.multi_reduction <add>, %52, %cst_41 [1] : vector<112x8xf32> to vector<112xf32>
    %54 = vector.shape_cast %53 : vector<112xf32> to vector<112x1xf32>
    %cst_42 = arith.constant dense<0.000000e+00> : vector<1xf32>
    %55 = vector.multi_reduction <add>, %54, %cst_42 [0] : vector<112x1xf32> to vector<1xf32>
    %56 = vector.shape_cast %55 : vector<1xf32> to vector<1x1xf32>
    %c0_43 = arith.constant 0 : index
    %c6 = arith.constant 6 : index
    %c0_44 = arith.constant 0 : index
    %c0_45 = arith.constant 0 : index
    %57 = vector.load %arg6[%c0_43, %c6, %c0_44, %c0_45] : memref<1x7x112x8xf32, #tpu.memory_space<vmem>>, vector<1x1x112x8xf32>
    %58 = vector.shape_cast %57 : vector<1x1x112x8xf32> to vector<112x8xf32>
    %59 = arith.mulf %14, %58 : vector<112x8xf32>
    %cst_46 = arith.constant dense<0.000000e+00> : vector<112xf32>
    %60 = vector.multi_reduction <add>, %59, %cst_46 [1] : vector<112x8xf32> to vector<112xf32>
    %61 = vector.shape_cast %60 : vector<112xf32> to vector<112x1xf32>
    %cst_47 = arith.constant dense<0.000000e+00> : vector<1xf32>
    %62 = vector.multi_reduction <add>, %61, %cst_47 [0] : vector<112x1xf32> to vector<1xf32>
    %63 = vector.shape_cast %62 : vector<1xf32> to vector<1x1xf32>
    %64 = tpu.concatenate %21, %28, %35, %42, %49, %56, %63 in 1 : vector<1x1xf32>, vector<1x1xf32>, vector<1x1xf32>, vector<1x1xf32>, vector<1x1xf32>, vector<1x1xf32>, vector<1x1xf32> -> vector<1x7xf32>
    %c0_48 = arith.constant 0 : index
    %c0_49 = arith.constant 0 : index
    %c0_50 = arith.constant 0 : index
    %c0_51 = arith.constant 0 : index
    %65 = vector.load %arg7[%c0_48, %c0_49, %c0_50, %c0_51] : memref<1x1x1x7xf32, #tpu.memory_space<vmem>>, vector<1x1x1x7xf32>
    %66 = vector.shape_cast %65 : vector<1x1x1x7xf32> to vector<1x7xf32>
    %67 = vector.shape_cast %64 : vector<1x7xf32> to vector<1x1x1x7xf32>
    tpu.vector_store %arg7[%c0_48, %c0_49, %c0_50, %c0_51], %67 {strides = array<i32>} : memref<1x1x1x7xf32, #tpu.memory_space<vmem>>, vector<1x1x1x7xf32>,
    return
  }
  func.func @transform_0(%arg0: i32, %arg1: i32) -> (i32, i32, i32) {
    %c0_i32 = arith.constant 0 : i32
    %c0_i32_0 = arith.constant 0 : i32
    %c0_i32_1 = arith.constant 0 : i32
    return %arg1, %c0_i32, %c0_i32_0 : i32, i32, i32
  }
  func.func @transform_1(%arg0: i32, %arg1: i32) -> (i32, i32, i32) {
    %c0_i32 = arith.constant 0 : i32
    %c0_i32_0 = arith.constant 0 : i32
    %c0_i32_1 = arith.constant 0 : i32
    return %arg0, %c0_i32, %c0_i32_0 : i32, i32, i32
  }
  func.func @transform_2(%arg0: i32, %arg1: i32) -> (i32, i32) {
    %c0_i32 = arith.constant 0 : i32
    %c0_i32_0 = arith.constant 0 : i32
    %c0_i32_1 = arith.constant 0 : i32
    return %c0_i32, %c0_i32_0 : i32, i32
  }
  func.func @transform_3(%arg0: i32, %arg1: i32) -> (i32, i32) {
    %c0_i32 = arith.constant 0 : i32
    %c0_i32_0 = arith.constant 0 : i32
    %c0_i32_1 = arith.constant 0 : i32
    return %c0_i32, %c0_i32_0 : i32, i32
  }
  func.func @transform_4(%arg0: i32, %arg1: i32) -> (i32, i32, i32, i32) {
    %c0_i32 = arith.constant 0 : i32
    %c0_i32_0 = arith.constant 0 : i32
    %c0_i32_1 = arith.constant 0 : i32
    %c0_i32_2 = arith.constant 0 : i32
    return %arg0, %c0_i32, %c0_i32_0, %c0_i32_1 : i32, i32, i32, i32
  }
  func.func @transform_5(%arg0: i32, %arg1: i32) -> (i32, i32, i32, i32) {
    %c0_i32 = arith.constant 0 : i32
    %c0_i32_0 = arith.constant 0 : i32
    %c0_i32_1 = arith.constant 0 : i32
    return %arg1, %arg0, %c0_i32, %c0_i32_0 : i32, i32, i32, i32
  }
}

</mosaic_0001>

<llo_original>
// kernel: emotion_model_forward.1
$region0: #{emotion_model_forward.1}
  #allocation0 [shape = 'u32[]', space=smem, size = 0x4, offset = 0x4, fixed_abs, tag = 'smem constant byte address 0x4 - core index']
  #allocation1 [shape = 'u32[144,128]{1,0:T(1,128)}', space=vmem, size = 0x12000, scoped, tag = 'internal scratch']
  %s0 = inlined_call_operand.vmem [shape: f32[2,54,16], index: 0, kind: input, shape index: {}]
  %s1 = inlined_call_operand.vmem [shape: f32[2,224,54], index: 1, kind: input, shape index: {}]
  %s2 = inlined_call_operand.vmem [shape: f32[16,8], index: 2, kind: input, shape index: {}]
  %s3 = inlined_call_operand.vmem [shape: f32[16,8], index: 3, kind: input, shape index: {}]
  %s4 = inlined_call_operand.vmem [shape: f32[2,7,112,8], index: 4, kind: input, shape index: {}]
  %s5 = inlined_call_operand.vmem [shape: f32[2,2,1,7], index: 5, kind: output, shape index: {}]
  %s6 = sld [smem:[#allocation0]]
  $region53: #{emotion_model_forward.1} parent=0
    _
  %s8 = ssub.s32 1, %s6
  %s9 = scalar_select 0, %s8, %s6
  loop: start=0, step=1, limit=6
  $region2: #{emotion_model_forward.1} parent=0 // loop_pre_header
    _
  $region3: #{emotion_model_forward.1} parent=0 // loop_header
    %s11 = sphi 0, %s15
    %p12 = scmp.ge.s32.totalorder %s11, 6
    %s18 = sphi 0, %s30
    %s19 = sphi 0, %s26
    %s20 = sphi 0, %s18
    %s21 = sphi 0, %s19
    %s22 = sphi 0, %s20
    %s23 = sphi 0, %s21
    %s33 = sphi 0, %s35
    %s36 = sphi 0, %s33
    %s37 = sphi 0, %s36
    %s53 = sphi 0, %s37
    %s59 = sphi 0, %s61
    %s62 = sphi 0, %s59
    %s63 = sphi 0, %s62
    %s79 = sphi 0, %s63
    %s83 = sphi 0, %s83
    %s85 = sphi 0, %s83
    %s86 = sphi 0, %s85
    %s100 = sphi 0, %s86
    %s104 = sphi 0, %s104
    %s106 = sphi 0, %s104
    %s107 = sphi 0, %s106
    %s121 = sphi 0, %s107
    %s127 = sphi 0, %s129
    %s130 = sphi 0, %s127
    %s131 = sphi 0, %s130
    %s147 = sphi 0, %s131
    %s155 = sphi 0, %s157
    %s158 = sphi 0, %s155
    %s159 = sphi 0, %s158
    %s175 = sphi 0, %s159
  $region4: #{emotion_model_forward.1} parent=0 // loop_header_branch
    %14 = sbr.rel (%p12) target = $region8
  $region5: #{emotion_model_forward.1} parent=0 // loop_body
    %s16 = ssub.s32 %s11, 1
    %s17 = ssub.s32 %s11, 2
    %s24 = sadd.s32 1, %s19
    %p25 = scmp.ge.s32.totalorder %s24, 2
    %s26 = scalar_select %p25, 0, %s24
    %s27 = sadd.s32 1, %s18
    %s28 = scalar_select %p25, %s27, %s18
    %p29 = scmp.ge.s32.totalorder %s28, 2
    %s30 = scalar_select %p29, 0, %s28
    %s31 = ssub.s32 %s19, %s26
    %p32 = scmp.eq.s32.totalorder %s31, 0
    %s34 = sadd.s32 %s33, 1
    %s35 = scalar_select %p32, %s33, %s34
    %p38 = pneg %p32
    %p39 = scmp.eq.s32.totalorder %s11, 3
    %p40 = por %p38, %p39
    %p41 = scmp.ne.s32.totalorder %s33, %s36
    %p42 = scmp.eq.s32.totalorder %s11, 0
    %p43 = por %p41, %p42
    %p44 = scmp.ne.s32.totalorder %s33, %s36
    %p45 = scmp.eq.s32.totalorder %s16, 3
    %p46 = por %p44, %p45
    %p47 = scmp.ne.s32.totalorder %s36, %s37
    %p48 = scmp.eq.s32.totalorder %s16, 0
    %p49 = por %p47, %p48
    %p50 = scmp.ne.s32.totalorder %s36, %s37
    %p51 = scmp.eq.s32.totalorder %s17, 3
    %p52 = por %p50, %p51
    %p54 = scmp.ne.s32.totalorder %s37, %s53
    %p55 = scmp.eq.s32.totalorder %s17, 0
    %p56 = por %p54, %p55
    %s57 = ssub.s32 %s18, %s30
    %p58 = scmp.eq.s32.totalorder %s57, 0
    %s60 = sadd.s32 %s59, 1
    %s61 = scalar_select %p58, %s59, %s60
    %p64 = pneg %p58
    %p65 = scmp.eq.s32.totalorder %s11, 3
    %p66 = por %p64, %p65
    %p67 = scmp.ne.s32.totalorder %s59, %s62
    %p68 = scmp.eq.s32.totalorder %s11, 0
    %p69 = por %p67, %p68
    %p70 = scmp.ne.s32.totalorder %s59, %s62
    %p71 = scmp.eq.s32.totalorder %s16, 3
    %p72 = por %p70, %p71
    %p73 = scmp.ne.s32.totalorder %s62, %s63
    %p74 = scmp.eq.s32.totalorder %s16, 0
    %p75 = por %p73, %p74
    %p76 = scmp.ne.s32.totalorder %s62, %s63
    %p77 = scmp.eq.s32.totalorder %s17, 3
    %p78 = por %p76, %p77
    %p80 = scmp.ne.s32.totalorder %s63, %s79
    %p81 = scmp.eq.s32.totalorder %s17, 0
    %p82 = por %p80, %p81
    %s84 = sadd.s32 %s83, 1
    %p87 = scmp.eq.s32.totalorder %s11, 3
    %p88 = scmp.ne.s32.totalorder %s83, %s85
    %p89 = scmp.eq.s32.totalorder %s11, 0
    %p90 = por %p88, %p89
    %p91 = scmp.ne.s32.totalorder %s83, %s85
    %p92 = scmp.eq.s32.totalorder %s16, 3
    %p93 = por %p91, %p92
    %p94 = scmp.ne.s32.totalorder %s85, %s86
    %p95 = scmp.eq.s32.totalorder %s16, 0
    %p96 = por %p94, %p95
    %p97 = scmp.ne.s32.totalorder %s85, %s86
    %p98 = scmp.eq.s32.totalorder %s17, 3
    %p99 = por %p97, %p98
    %p101 = scmp.ne.s32.totalorder %s86, %s100
    %p102 = scmp.eq.s32.totalorder %s17, 0
    %p103 = por %p101, %p102
    %s105 = sadd.s32 %s104, 1
    %p108 = scmp.eq.s32.totalorder %s11, 3
    %p109 = scmp.ne.s32.totalorder %s104, %s106
    %p110 = scmp.eq.s32.totalorder %s11, 0
    %p111 = por %p109, %p110
    %p112 = scmp.ne.s32.totalorder %s104, %s106
    %p113 = scmp.eq.s32.totalorder %s16, 3
    %p114 = por %p112, %p113
    %p115 = scmp.ne.s32.totalorder %s106, %s107
    %p116 = scmp.eq.s32.totalorder %s16, 0
    %p117 = por %p115, %p116
    %p118 = scmp.ne.s32.totalorder %s106, %s107
    %p119 = scmp.eq.s32.totalorder %s17, 3
    %p120 = por %p118, %p119
    %p122 = scmp.ne.s32.totalorder %s107, %s121
    %p123 = scmp.eq.s32.totalorder %s17, 0
    %p124 = por %p122, %p123
    %s125 = ssub.s32 %s18, %s30
    %p126 = scmp.eq.s32.totalorder %s125, 0
    %s128 = sadd.s32 %s127, 1
    %s129 = scalar_select %p126, %s127, %s128
    %p132 = pneg %p126
    %p133 = scmp.eq.s32.totalorder %s11, 3
    %p134 = por %p132, %p133
    %p135 = scmp.ne.s32.totalorder %s127, %s130
    %p136 = scmp.eq.s32.totalorder %s11, 0
    %p137 = por %p135, %p136
    %p138 = scmp.ne.s32.totalorder %s127, %s130
    %p139 = scmp.eq.s32.totalorder %s16, 3
    %p140 = por %p138, %p139
    %p141 = scmp.ne.s32.totalorder %s130, %s131
    %p142 = scmp.eq.s32.totalorder %s16, 0
    %p143 = por %p141, %p142
    %p144 = scmp.ne.s32.totalorder %s130, %s131
    %p145 = scmp.eq.s32.totalorder %s17, 3
    %p146 = por %p144, %p145
    %p148 = scmp.ne.s32.totalorder %s131, %s147
    %p149 = scmp.eq.s32.totalorder %s17, 0
    %p150 = por %p148, %p149
    %s151 = ssub.s32 %s19, %s26
    %s152 = ssub.s32 %s18, %s30
    %s153 = sor.u32 %s151, %s152
    %p154 = scmp.eq.s32.totalorder %s153, 0
    %s156 = sadd.s32 %s155, 1
    %s157 = scalar_select %p154, %s155, %s156
    %p160 = pneg %p154
    %p161 = scmp.eq.s32.totalorder %s11, 3
    %p162 = por %p160, %p161
    %p163 = scmp.ne.s32.totalorder %s155, %s158
    %p164 = scmp.eq.s32.totalorder %s11, 0
    %p165 = por %p163, %p164
    %p166 = scmp.ne.s32.totalorder %s155, %s158
    %p167 = scmp.eq.s32.totalorder %s16, 3
    %p168 = por %p166, %p167
    %p169 = scmp.ne.s32.totalorder %s158, %s159
    %p170 = scmp.eq.s32.totalorder %s16, 0
    %p171 = por %p169, %p170
    %p172 = scmp.ne.s32.totalorder %s158, %s159
    %p173 = scmp.eq.s32.totalorder %s17, 3
    %p174 = por %p172, %p173
    %p176 = scmp.ne.s32.totalorder %s159, %s175
    %p177 = scmp.eq.s32.totalorder %s17, 0
    %p178 = por %p176, %p177
    %p179 = scmp.le.s32.totalorder 1, %s11
    %p180 = scmp.lt.s32.totalorder %s11, 5
    %p181 = pnand %p179, %p180
    %p182 = pneg %p181
    // Predicated region
    $region9: #{emotion_model_forward.1} parent=5 // pred_check
      _
    $region10: #{emotion_model_forward.1} parent=5 // pred_check_branch
      %184 = sbr.rel (%p181) target = $region12
    $region11: #{emotion_model_forward.1} parent=5 // pred_region
      %s185 = ssub.s32 %s11, 1
      // Predicated region
      $region13: #{emotion_model_forward.1} parent=11 // pred_check
        %p186 = pneg %p96
      $region14: #{emotion_model_forward.1} parent=11 // pred_check_branch
        %188 = sbr.rel (%p186) target = $region16
      $region15: #{emotion_model_forward.1} parent=11 // pred_region
        _
      $region16: #{emotion_model_forward.1} parent=11 // pred_fallthru
        _
      // Predicated region
      $region17: #{emotion_model_forward.1} parent=11 // pred_check
        %p189 = pneg %p117
      $region18: #{emotion_model_forward.1} parent=11 // pred_check_branch
        %191 = sbr.rel (%p189) target = $region20
      $region19: #{emotion_model_forward.1} parent=11 // pred_region
        _
      $region20: #{emotion_model_forward.1} parent=11 // pred_fallthru
        _
    $region12: #{emotion_model_forward.1} parent=5 // pred_fallthru
      _
    %p192 = scmp.lt.s32.totalorder %s11, 4
    // Predicated region
    $region21: #{emotion_model_forward.1} parent=5 // pred_check
      %p193 = pneg %p192
    $region22: #{emotion_model_forward.1} parent=5 // pred_check_branch
      %195 = sbr.rel (%p193) target = $region24
    $region23: #{emotion_model_forward.1} parent=5 // pred_region
      // Predicated region
      $region25: #{emotion_model_forward.1} parent=23 // pred_check
        %p196 = pneg %p43
      $region26: #{emotion_model_forward.1} parent=23 // pred_check_branch
        %198 = sbr.rel (%p196) target = $region28
      $region27: #{emotion_model_forward.1} parent=23 // pred_region
        %p199 = scmp.lt.s32.totalorder %s19, 1
        %s200 = scalar_select %p199, %s19, 1
        %s201 = smul.addr %s200, 7
        %s202 = smul.addr %s201, 8
        %s203 = scalar_lea.vmem %s0, %s202
      $region28: #{emotion_model_forward.1} parent=23 // pred_fallthru
        _
      // Predicated region
      $region29: #{emotion_model_forward.1} parent=23 // pred_check
        %p204 = pneg %p69
      $region30: #{emotion_model_forward.1} parent=23 // pred_check_branch
        %206 = sbr.rel (%p204) target = $region32
      $region31: #{emotion_model_forward.1} parent=23 // pred_region
        %p207 = scmp.lt.s32.totalorder %s18, 1
        %s208 = scalar_select %p207, %s18, 1
        %s209 = smul.addr %s208, 28
        %s210 = smul.addr %s209, 8
        %s211 = scalar_lea.vmem %s1, %s210
      $region32: #{emotion_model_forward.1} parent=23 // pred_fallthru
        _
      // Predicated region
      $region33: #{emotion_model_forward.1} parent=23 // pred_check
        %p212 = pneg %p137
      $region34: #{emotion_model_forward.1} parent=23 // pred_check_branch
        %214 = sbr.rel (%p212) target = $region36
      $region35: #{emotion_model_forward.1} parent=23 // pred_region
        %p215 = scmp.lt.s32.totalorder %s18, 1
        %s216 = scalar_select %p215, %s18, 1
        %s217 = smul.addr %s216, 98
        %s218 = smul.addr %s217, 8
        %s219 = scalar_lea.vmem %s4, %s218
      $region36: #{emotion_model_forward.1} parent=23 // pred_fallthru
        _
    $region24: #{emotion_model_forward.1} parent=5 // pred_fallthru
      _
    %p220 = scmp.le.s32.totalorder 1, %s11
    %p221 = scmp.lt.s32.totalorder %s11, 5
    %p222 = pnand %p220, %p221
    %p223 = pneg %p222
    // Predicated region
    $region37: #{emotion_model_forward.1} parent=5 // pred_check
      _
    $region38: #{emotion_model_forward.1} parent=5 // pred_check_branch
      %225 = sbr.rel (%p222) target = $region40
    $region39: #{emotion_model_forward.1} parent=5 // pred_region
      %s226 = ssub.s32 %s11, 1
      %p227 = scmp.lt.s32.totalorder %s21, 1
      %s228 = scalar_select %p227, %s21, 1
      %s229 = smul.addr %s228, 7
      %s230 = smul.addr %s229, 8
      %s231 = scalar_lea.vmem %s0, %s230
      %p232 = pneg %p49
      %p233 = pneg %p46
      %p234 = scmp.lt.s32.totalorder %s20, 1
      %s235 = scalar_select %p234, %s20, 1
      %s236 = smul.addr %s235, 28
      %s237 = smul.addr %s236, 8
      %s238 = scalar_lea.vmem %s1, %s237
      %p239 = pneg %p75
      %p240 = pneg %p72
      %p241 = pneg %p96
      %p242 = pneg %p93
      %p243 = pneg %p117
      %p244 = pneg %p114
      %p245 = scmp.lt.s32.totalorder %s20, 1
      %s246 = scalar_select %p245, %s20, 1
      %s247 = smul.addr %s246, 98
      %s248 = smul.addr %s247, 8
      %s249 = scalar_lea.vmem %s4, %s248
      %p250 = pneg %p143
      %p251 = pneg %p140
      %p252 = pneg %p171
      %p253 = pneg %p168
      %p254 = scmp.lt.s32.totalorder %s21, 1
      %s255 = scalar_select %p254, %s21, 1
      %p256 = scmp.lt.s32.totalorder %s20, 1
      %s257 = scalar_select %p256, %s20, 1
      %s258 = smul.addr %s255, 2
      %s259 = sadd.s32 %s257, %s258
      %s260 = scalar_lea.vmem %s5, %s259
      %p261 = scmp.lt.s32.totalorder %s21, 1
      %s262 = scalar_select %p261, %s21, 1
      %s263 = smul.addr %s262, 7
      %s264 = smul.addr %s263, 8
      %s265 = scalar_lea.vmem %s0, %s264
      %p266 = scmp.lt.s32.totalorder %s20, 1
      %s267 = scalar_select %p266, %s20, 1
      %s268 = smul.addr %s267, 28
      %s269 = smul.addr %s268, 8
      %s270 = scalar_lea.vmem %s1, %s269
      %p271 = scmp.lt.s32.totalorder %s20, 1
      %s272 = scalar_select %p271, %s20, 1
      %s273 = smul.addr %s272, 98
      %s274 = smul.addr %s273, 8
      %s275 = scalar_lea.vmem %s4, %s274
      %p276 = scmp.lt.s32.totalorder %s21, 1
      %s277 = scalar_select %p276, %s21, 1
      %p278 = scmp.lt.s32.totalorder %s20, 1
      %s279 = scalar_select %p278, %s20, 1
      %s280 = smul.addr %s277, 2
      %s281 = sadd.s32 %s279, %s280
      %s282 = scalar_lea.vmem %s5, %s281
      %v283 = vld [vmem:[%s270] sm:$0xff]
      %v284 = vld [vmem:[%s270 + $0x8] sm:$0xff]
      %v285 = vld [vmem:[%s270 + $0x10] sm:$0xff]
      %v286 = vld [vmem:[%s270 + $0x18] sm:$0xff]
      %v287 = vld [vmem:[%s270 + $0x20] sm:$0xff]
      %v288 = vld [vmem:[%s270 + $0x28] sm:$0xff]
      %v289 = vld [vmem:[%s270 + $0x30] sm:$0xff]
      %v290 = vld [vmem:[%s270 + $0x38] sm:$0xff]
      %v291 = vld [vmem:[%s270 + $0x40] sm:$0xff]
      %v292 = vld [vmem:[%s270 + $0x48] sm:$0xff]
      %v293 = vld [vmem:[%s270 + $0x50] sm:$0xff]
      %v294 = vld [vmem:[%s270 + $0x58] sm:$0xff]
      %v295 = vld [vmem:[%s270 + $0x60] sm:$0xff]
      %v296 = vld [vmem:[%s270 + $0x68] sm:$0xff]
      %v297 = vld [vmem:[%s270 + $0x70] sm:$0xff]
      %v298 = vld [vmem:[%s270 + $0x78] sm:$0xff]
      %v299 = vld [vmem:[%s270 + $0x80] sm:$0xff]
      %v300 = vld [vmem:[%s270 + $0x88] sm:$0xff]
      %v301 = vld [vmem:[%s270 + $0x90] sm:$0xff]
      %v302 = vld [vmem:[%s270 + $0x98] sm:$0xff]
      %v303 = vld [vmem:[%s270 + $0xa0] sm:$0xff]
      %v304 = vld [vmem:[%s270 + $0xa8] sm:$0xff]
      %v305 = vld [vmem:[%s270 + $0xb0] sm:$0xff]
      %v306 = vld [vmem:[%s270 + $0xb8] sm:$0xff]
      %v307 = vld [vmem:[%s270 + $0xc0] sm:$0xff]
      %v308 = vld [vmem:[%s270 + $0xc8] sm:$0xff]
      %v309 = vld [vmem:[%s270 + $0xd0] sm:$0xff]
      %v310 = vld [vmem:[%s270 + $0xd8] sm:$0xff]
      %v311 = vld [vmem:[%s265] sm:$0xff]
      %v312 = vld [vmem:[%s265 + $0x8] sm:$0xff]
      %v313 = vld [vmem:[%s265 + $0x10] sm:$0xff]
      %v314 = vld [vmem:[%s265 + $0x18] sm:$0xff]
      %v315 = vld [vmem:[%s265 + $0x20] sm:$0xff]
      %v316 = vld [vmem:[%s265 + $0x28] sm:$0xff]
      %v317 = vld [vmem:[%s265 + $0x30] sm:$0x3f]
      %vm318 = vcmask 441344
      %v320 = vsel %vm318, %v283, 0
      %v323 = vsel %vm318, %v284, 0
      %v326 = vsel %vm318, %v285, 0
      %v329 = vsel %vm318, %v286, 0
      %v332 = vsel %vm318, %v287, 0
      %v335 = vsel %vm318, %v288, 0
      %v338 = vsel %vm318, %v289, 0
      %v341 = vsel %vm318, %v290, 0
      %v344 = vsel %vm318, %v291, 0
      %v347 = vsel %vm318, %v292, 0
      %v350 = vsel %vm318, %v293, 0
      %v353 = vsel %vm318, %v294, 0
      %v356 = vsel %vm318, %v295, 0
      %v359 = vsel %vm318, %v296, 0
      %v362 = vsel %vm318, %v297, 0
      %v365 = vsel %vm318, %v298, 0
      %v368 = vsel %vm318, %v299, 0
      %v371 = vsel %vm318, %v300, 0
      %v374 = vsel %vm318, %v301, 0
      %v377 = vsel %vm318, %v302, 0
      %v380 = vsel %vm318, %v303, 0
      %v383 = vsel %vm318, %v304, 0
      %v386 = vsel %vm318, %v305, 0
      %v389 = vsel %vm318, %v306, 0
      %v392 = vsel %vm318, %v307, 0
      %v395 = vsel %vm318, %v308, 0
      %v398 = vsel %vm318, %v309, 0
      %v401 = vsel %vm318, %v310, 0
      %vm403 = vcmask 1045504
      %v405 = vsel %vm403, %v317, 0
      %407 = vmatprep.subr.mxu0 0.0
      %408 = vmatpush1.msra.mxu0 %v311
      %409 = vmatprep.subr.mxu0 0.0
      %410 = vmatpush1.msra.mxu0 %v312
      %411 = vmatprep.subr.mxu0 0.0
      %412 = vmatpush1.msra.mxu0 %v313
      %413 = vmatprep.subr.mxu0 0.0
      %414 = vmatpush1.msra.mxu0 %v314
      %415 = vmatprep.subr.mxu0 0.0
      %416 = vmatpush1.msra.mxu0 %v315
      %417 = vmatprep.subr.mxu0 0.0
      %418 = vmatpush1.msra.mxu0 %v316
      %419 = vmatprep.subr.mxu0 0.0
      %420 = vmatpush1.msra.mxu0 %v405
      %421 = vmatprep.subr.mxu0 0.0
      %422 = vmatpush1.msra.mxu0 0.0
      %423 = vmatprep.subr.mxu0 0.0
      %424 = vmatpush1.msra.mxu0 0.0
      %425 = vmatprep.subr.mxu0 0.0
      %426 = vmatpush1.msra.mxu0 0.0
      %427 = vmatprep.subr.mxu0 0.0
      %428 = vmatpush1.msra.mxu0 0.0
      %429 = vmatprep.subr.mxu0 0.0
      %430 = vmatpush1.msra.mxu0 0.0
      %431 = vmatprep.subr.mxu0 0.0
      %432 = vmatpush1.msra.mxu0 0.0
      %433 = vmatprep.subr.mxu0 0.0
      %434 = vmatpush1.msra.mxu0 0.0
      %435 = vmatprep.subr.mxu0 0.0
      %436 = vmatpush1.msra.mxu0 0.0
      %437 = vmatprep.subr.mxu0 0.0
      %438 = vmatpush1.msra.mxu0 0.0
      %439 = vmatprep.subr.mxu0 0.0
      %440 = vmatpush1.msra.mxu0 0.0
      %441 = vmatprep.subr.mxu0 0.0
      %442 = vmatpush1.msra.mxu0 0.0
      %443 = vmatprep.subr.mxu0 0.0
      %444 = vmatpush1.msra.mxu0 0.0
      %445 = vmatprep.subr.mxu0 0.0
      %446 = vmatpush1.msra.mxu0 0.0
      %447 = vmatprep.subr.mxu0 0.0
      %448 = vmatpush1.msra.mxu0 0.0
      %449 = vmatprep.subr.mxu0 0.0
      %450 = vmatpush1.msra.mxu0 0.0
      %451 = vmatprep.subr.mxu0 0.0
      %452 = vmatpush1.msra.mxu0 0.0
      %453 = vmatprep.subr.mxu0 0.0
      %454 = vmatpush1.msra.mxu0 0.0
      %455 = vmatprep.subr.mxu0 0.0
      %456 = vmatpush1.msra.mxu0 0.0
      %457 = vmatprep.subr.mxu0 0.0
      %458 = vmatpush1.msra.mxu0 0.0
      %459 = vmatprep.subr.mxu0 0.0
      %460 = vmatpush1.msra.mxu0 0.0
      %461 = vmatprep.subr.mxu0 0.0
      %462 = vmatpush1.msra.mxu0 0.0
      %463 = vmatprep.subr.mxu0 0.0
      %464 = vmatpush1.msra.mxu0 0.0
      %465 = vmatprep.subr.mxu0 0.0
      %466 = vmatpush1.msra.mxu0 0.0
      %467 = vmatprep.subr.mxu0 0.0
      %468 = vmatpush1.msra.mxu0 0.0
      %469 = vmatprep.subr.mxu0 0.0
      %470 = vmatpush1.msra.mxu0 0.0
      %471 = vmatprep.mubr.f32.mxu0 0.0
      %472 = vmatmul.mubr.f32.gmra.mrb[0].mxu0 %v320
      %v473 = vpop.f32.mrb[0].mxu0
      %v474 = vadd.f32 0.0, %v473
      %v475 = vpop.f32.mrb[0].mxu0
      %476 = vmatprep.mubr.f32.mxu0 0.0
      %477 = vmatmul.mubr.f32.gmra.mrb[0].mxu0 %v323
      %v478 = vpop.f32.mrb[0].mxu0
      %v479 = vadd.f32 0.0, %v478
      %v480 = vpop.f32.mrb[0].mxu0
      %481 = vmatprep.mubr.f32.mxu0 0.0
      %482 = vmatmul.mubr.f32.gmra.mrb[0].mxu0 %v326
      %v483 = vpop.f32.mrb[0].mxu0
      %v484 = vadd.f32 0.0, %v483
      %v485 = vpop.f32.mrb[0].mxu0
      %486 = vmatprep.mubr.f32.mxu0 0.0
      %487 = vmatmul.mubr.f32.gmra.mrb[0].mxu0 %v329
      %v488 = vpop.f32.mrb[0].mxu0
      %v489 = vadd.f32 0.0, %v488
      %v490 = vpop.f32.mrb[0].mxu0
      %491 = vmatprep.mubr.f32.mxu0 0.0
      %492 = vmatmul.mubr.f32.gmra.mrb[0].mxu0 %v332
      %v493 = vpop.f32.mrb[0].mxu0
      %v494 = vadd.f32 0.0, %v493
      %v495 = vpop.f32.mrb[0].mxu0
      %496 = vmatprep.mubr.f32.mxu0 0.0
      %497 = vmatmul.mubr.f32.gmra.mrb[0].mxu0 %v335
      %v498 = vpop.f32.mrb[0].mxu0
      %v499 = vadd.f32 0.0, %v498
      %v500 = vpop.f32.mrb[0].mxu0
      %501 = vmatprep.mubr.f32.mxu0 0.0
      %502 = vmatmul.mubr.f32.gmra.mrb[0].mxu0 %v338
      %v503 = vpop.f32.mrb[0].mxu0
      %v504 = vadd.f32 0.0, %v503
      %v505 = vpop.f32.mrb[0].mxu0
      %506 = vmatprep.mubr.f32.mxu0 0.0
      %507 = vmatmul.mubr.f32.gmra.mrb[0].mxu0 %v341
      %v508 = vpop.f32.mrb[0].mxu0
      %v509 = vadd.f32 0.0, %v508
      %v510 = vpop.f32.mrb[0].mxu0
      %511 = vmatprep.mubr.f32.mxu0 0.0
      %512 = vmatmul.mubr.f32.gmra.mrb[0].mxu0 %v344
      %v513 = vpop.f32.mrb[0].mxu0
      %v514 = vadd.f32 0.0, %v513
      %v515 = vpop.f32.mrb[0].mxu0
      %516 = vmatprep.mubr.f32.mxu0 0.0
      %517 = vmatmul.mubr.f32.gmra.mrb[0].mxu0 %v347
      %v518 = vpop.f32.mrb[0].mxu0
      %v519 = vadd.f32 0.0, %v518
      %v520 = vpop.f32.mrb[0].mxu0
      %521 = vmatprep.mubr.f32.mxu0 0.0
      %522 = vmatmul.mubr.f32.gmra.mrb[0].mxu0 %v350
      %v523 = vpop.f32.mrb[0].mxu0
      %v524 = vadd.f32 0.0, %v523
      %v525 = vpop.f32.mrb[0].mxu0
      %526 = vmatprep.mubr.f32.mxu0 0.0
      %527 = vmatmul.mubr.f32.gmra.mrb[0].mxu0 %v353
      %v528 = vpop.f32.mrb[0].mxu0
      %v529 = vadd.f32 0.0, %v528
      %v530 = vpop.f32.mrb[0].mxu0
      %531 = vmatprep.mubr.f32.mxu0 0.0
      %532 = vmatmul.mubr.f32.gmra.mrb[0].mxu0 %v356
      %v533 = vpop.f32.mrb[0].mxu0
      %v534 = vadd.f32 0.0, %v533
      %v535 = vpop.f32.mrb[0].mxu0
      %536 = vmatprep.mubr.f32.mxu0 0.0
      %537 = vmatmul.mubr.f32.gmra.mrb[0].mxu0 %v359
      %v538 = vpop.f32.mrb[0].mxu0
      %v539 = vadd.f32 0.0, %v538
      %v540 = vpop.f32.mrb[0].mxu0
      %541 = vmatprep.mubr.f32.mxu0 0.0
      %542 = vmatmul.mubr.f32.gmra.mrb[0].mxu0 %v362
      %v543 = vpop.f32.mrb[0].mxu0
      %v544 = vadd.f32 0.0, %v543
      %v545 = vpop.f32.mrb[0].mxu0
      %546 = vmatprep.mubr.f32.mxu0 0.0
      %547 = vmatmul.mubr.f32.gmra.mrb[0].mxu0 %v365
      %v548 = vpop.f32.mrb[0].mxu0
      %v549 = vadd.f32 0.0, %v548
      %v550 = vpop.f32.mrb[0].mxu0
      %551 = vmatprep.mubr.f32.mxu0 0.0
      %552 = vmatmul.mubr.f32.gmra.mrb[0].mxu0 %v368
      %v553 = vpop.f32.mrb[0].mxu0
      %v554 = vadd.f32 0.0, %v553
      %v555 = vpop.f32.mrb[0].mxu0
      %556 = vmatprep.mubr.f32.mxu0 0.0
      %557 = vmatmul.mubr.f32.gmra.mrb[0].mxu0 %v371
      %v558 = vpop.f32.mrb[0].mxu0
      %v559 = vadd.f32 0.0, %v558
      %v560 = vpop.f32.mrb[0].mxu0
      %561 = vmatprep.mubr.f32.mxu0 0.0
      %562 = vmatmul.mubr.f32.gmra.mrb[0].mxu0 %v374
      %v563 = vpop.f32.mrb[0].mxu0
      %v564 = vadd.f32 0.0, %v563
      %v565 = vpop.f32.mrb[0].mxu0
      %566 = vmatprep.mubr.f32.mxu0 0.0
      %567 = vmatmul.mubr.f32.gmra.mrb[0].mxu0 %v377
      %v568 = vpop.f32.mrb[0].mxu0
      %v569 = vadd.f32 0.0, %v568
      %v570 = vpop.f32.mrb[0].mxu0
      %571 = vmatprep.mubr.f32.mxu0 0.0
      %572 = vmatmul.mubr.f32.gmra.mrb[0].mxu0 %v380
      %v573 = vpop.f32.mrb[0].mxu0
      %v574 = vadd.f32 0.0, %v573
      %v575 = vpop.f32.mrb[0].mxu0
      %576 = vmatprep.mubr.f32.mxu0 0.0
      %577 = vmatmul.mubr.f32.gmra.mrb[0].mxu0 %v383
      %v578 = vpop.f32.mrb[0].mxu0
      %v579 = vadd.f32 0.0, %v578
      %v580 = vpop.f32.mrb[0].mxu0
      %581 = vmatprep.mubr.f32.mxu0 0.0
      %582 = vmatmul.mubr.f32.gmra.mrb[0].mxu0 %v386
      %v583 = vpop.f32.mrb[0].mxu0
      %v584 = vadd.f32 0.0, %v583
      %v585 = vpop.f32.mrb[0].mxu0
      %586 = vmatprep.mubr.f32.mxu0 0.0
      %587 = vmatmul.mubr.f32.gmra.mrb[0].mxu0 %v389
      %v588 = vpop.f32.mrb[0].mxu0
      %v589 = vadd.f32 0.0, %v588
      %v590 = vpop.f32.mrb[0].mxu0
      %591 = vmatprep.mubr.f32.mxu0 0.0
      %592 = vmatmul.mubr.f32.gmra.mrb[0].mxu0 %v392
      %v593 = vpop.f32.mrb[0].mxu0
      %v594 = vadd.f32 0.0, %v593
      %v595 = vpop.f32.mrb[0].mxu0
      %596 = vmatprep.mubr.f32.mxu0 0.0
      %597 = vmatmul.mubr.f32.gmra.mrb[0].mxu0 %v395
      %v598 = vpop.f32.mrb[0].mxu0
      %v599 = vadd.f32 0.0, %v598
      %v600 = vpop.f32.mrb[0].mxu0
      %601 = vmatprep.mubr.f32.mxu0 0.0
      %602 = vmatmul.mubr.f32.gmra.mrb[0].mxu0 %v398
      %v603 = vpop.f32.mrb[0].mxu0
      %v604 = vadd.f32 0.0, %v603
      %v605 = vpop.f32.mrb[0].mxu0
      %606 = vmatprep.mubr.f32.mxu0 0.0
      %607 = vmatmul.mubr.f32.gmra.mrb[0].mxu0 %v401
      %v608 = vpop.f32.mrb[0].mxu0
      %v609 = vadd.f32 0.0, %v608
      %v610 = vpop.f32.mrb[0].mxu0
      %611 = vdwg.mxu0
      %v612 = vmax.f32 %v474, 0.0
      %v613 = vmax.f32 %v479, 0.0
      %v614 = vmax.f32 %v484, 0.0
      %v615 = vmax.f32 %v489, 0.0
      %v616 = vmax.f32 %v494, 0.0
      %v617 = vmax.f32 %v499, 0.0
      %v618 = vmax.f32 %v504, 0.0
      %v619 = vmax.f32 %v509, 0.0
      %v620 = vmax.f32 %v514, 0.0
      %v621 = vmax.f32 %v519, 0.0
      %v622 = vmax.f32 %v524, 0.0
      %v623 = vmax.f32 %v529, 0.0
      %v624 = vmax.f32 %v534, 0.0
      %v625 = vmax.f32 %v539, 0.0
      %v626 = vmax.f32 %v544, 0.0
      %v627 = vmax.f32 %v549, 0.0
      %v628 = vmax.f32 %v554, 0.0
      %v629 = vmax.f32 %v559, 0.0
      %v630 = vmax.f32 %v564, 0.0
      %v631 = vmax.f32 %v569, 0.0
      %v632 = vmax.f32 %v574, 0.0
      %v633 = vmax.f32 %v579, 0.0
      %v634 = vmax.f32 %v584, 0.0
      %v635 = vmax.f32 %v589, 0.0
      %v636 = vmax.f32 %v594, 0.0
      %v637 = vmax.f32 %v599, 0.0
      %v638 = vmax.f32 %v604, 0.0
      %v639 = vmax.f32 %v609, 0.0
      %v640 = vld [vmem:[%s2] sm:$0xff]
      %v641 = vld [vmem:[%s2 + $0x8] sm:$0xff]
      %vm642 = vcmask 130048
      %v644 = vsel %vm642, %v612, 0
      %v647 = vsel %vm642, %v613, 0
      %v650 = vsel %vm642, %v614, 0
      %v653 = vsel %vm642, %v615, 0
      %v656 = vsel %vm642, %v616, 0
      %v659 = vsel %vm642, %v617, 0
      %v662 = vsel %vm642, %v618, 0
      %v665 = vsel %vm642, %v619, 0
      %v668 = vsel %vm642, %v620, 0
      %v671 = vsel %vm642, %v621, 0
      %v674 = vsel %vm642, %v622, 0
      %v677 = vsel %vm642, %v623, 0
      %v680 = vsel %vm642, %v624, 0
      %v683 = vsel %vm642, %v625, 0
      %v686 = vsel %vm642, %v626, 0
      %v689 = vsel %vm642, %v627, 0
      %v692 = vsel %vm642, %v628, 0
      %v695 = vsel %vm642, %v629, 0
      %v698 = vsel %vm642, %v630, 0
      %v701 = vsel %vm642, %v631, 0
      %v704 = vsel %vm642, %v632, 0
      %v707 = vsel %vm642, %v633, 0
      %v710 = vsel %vm642, %v634, 0
      %v713 = vsel %vm642, %v635, 0
      %v716 = vsel %vm642, %v636, 0
      %v719 = vsel %vm642, %v637, 0
      %v722 = vsel %vm642, %v638, 0
      %v725 = vsel %vm642, %v639, 0
      %727 = vmatprep.subr.mxu0 0.0
      %728 = vmatpush1.msra.mxu0 %v640
      %729 = vmatprep.subr.mxu0 0.0
      %730 = vmatpush1.msra.mxu0 %v641
      %731 = vmatprep.subr.mxu0 0.0
      %732 = vmatpush1.msra.mxu0 0.0
      %733 = vmatprep.subr.mxu0 0.0
      %734 = vmatpush1.msra.mxu0 0.0
      %735 = vmatprep.subr.mxu0 0.0
      %736 = vmatpush1.msra.mxu0 0.0
      %737 = vmatprep.subr.mxu0 0.0
      %738 = vmatpush1.msra.mxu0 0.0
      %739 = vmatprep.subr.mxu0 0.0
      %740 = vmatpush1.msra.mxu0 0.0
      %741 = vmatprep.subr.mxu0 0.0
      %742 = vmatpush1.msra.mxu0 0.0
      %743 = vmatprep.subr.mxu0 0.0
      %744 = vmatpush1.msra.mxu0 0.0
      %745 = vmatprep.subr.mxu0 0.0
      %746 = vmatpush1.msra.mxu0 0.0
      %747 = vmatprep.subr.mxu0 0.0
      %748 = vmatpush1.msra.mxu0 0.0
      %749 = vmatprep.subr.mxu0 0.0
      %750 = vmatpush1.msra.mxu0 0.0
      %751 = vmatprep.subr.mxu0 0.0
      %752 = vmatpush1.msra.mxu0 0.0
      %753 = vmatprep.subr.mxu0 0.0
      %754 = vmatpush1.msra.mxu0 0.0
      %755 = vmatprep.subr.mxu0 0.0
      %756 = vmatpush1.msra.mxu0 0.0
      %757 = vmatprep.subr.mxu0 0.0
      %758 = vmatpush1.msra.mxu0 0.0
      %759 = vmatprep.subr.mxu0 0.0
      %760 = vmatpush1.msra.mxu0 0.0
      %761 = vmatprep.subr.mxu0 0.0
      %762 = vmatpush1.msra.mxu0 0.0
      %763 = vmatprep.subr.mxu0 0.0
      %764 = vmatpush1.msra.mxu0 0.0
      %765 = vmatprep.subr.mxu0 0.0
      %766 = vmatpush1.msra.mxu0 0.0
      %767 = vmatprep.subr.mxu0 0.0
      %768 = vmatpush1.msra.mxu0 0.0
      %769 = vmatprep.subr.mxu0 0.0
      %770 = vmatpush1.msra.mxu0 0.0
      %771 = vmatprep.subr.mxu0 0.0
      %772 = vmatpush1.msra.mxu0 0.0
      %773 = vmatprep.subr.mxu0 0.0
      %774 = vmatpush1.msra.mxu0 0.0
      %775 = vmatprep.subr.mxu0 0.0
      %776 = vmatpush1.msra.mxu0 0.0
      %777 = vmatprep.subr.mxu0 0.0
      %778 = vmatpush1.msra.mxu0 0.0
      %779 = vmatprep.subr.mxu0 0.0
      %780 = vmatpush1.msra.mxu0 0.0
      %781 = vmatprep.subr.mxu0 0.0
      %782 = vmatpush1.msra.mxu0 0.0
      %783 = vmatprep.subr.mxu0 0.0
      %784 = vmatpush1.msra.mxu0 0.0
      %785 = vmatprep.subr.mxu0 0.0
      %786 = vmatpush1.msra.mxu0 0.0
      %787 = vmatprep.subr.mxu0 0.0
      %788 = vmatpush1.msra.mxu0 0.0
      %789 = vmatprep.subr.mxu0 0.0
      %790 = vmatpush1.msra.mxu0 0.0
      %791 = vmatprep.mubr.f32.mxu0 0.0
      %792 = vmatmul.mubr.f32.gmra.mrb[0].mxu0 %v644
      %v793 = vpop.f32.mrb[0].mxu0
      %v794 = vadd.f32 0.0, %v793
      %v795 = vpop.f32.mrb[0].mxu0
      %796 = vmatprep.mubr.f32.mxu0 0.0
      %797 = vmatmul.mubr.f32.gmra.mrb[0].mxu0 %v647
      %v798 = vpop.f32.mrb[0].mxu0
      %v799 = vadd.f32 0.0, %v798
      %v800 = vpop.f32.mrb[0].mxu0
      %801 = vmatprep.mubr.f32.mxu0 0.0
      %802 = vmatmul.mubr.f32.gmra.mrb[0].mxu0 %v650
      %v803 = vpop.f32.mrb[0].mxu0
      %v804 = vadd.f32 0.0, %v803
      %v805 = vpop.f32.mrb[0].mxu0
      %806 = vmatprep.mubr.f32.mxu0 0.0
      %807 = vmatmul.mubr.f32.gmra.mrb[0].mxu0 %v653
      %v808 = vpop.f32.mrb[0].mxu0
      %v809 = vadd.f32 0.0, %v808
      %v810 = vpop.f32.mrb[0].mxu0
      %811 = vmatprep.mubr.f32.mxu0 0.0
      %812 = vmatmul.mubr.f32.gmra.mrb[0].mxu0 %v656
      %v813 = vpop.f32.mrb[0].mxu0
      %v814 = vadd.f32 0.0, %v813
      %v815 = vpop.f32.mrb[0].mxu0
      %816 = vmatprep.mubr.f32.mxu0 0.0
      %817 = vmatmul.mubr.f32.gmra.mrb[0].mxu0 %v659
      %v818 = vpop.f32.mrb[0].mxu0
      %v819 = vadd.f32 0.0, %v818
      %v820 = vpop.f32.mrb[0].mxu0
      %821 = vmatprep.mubr.f32.mxu0 0.0
      %822 = vmatmul.mubr.f32.gmra.mrb[0].mxu0 %v662
      %v823 = vpop.f32.mrb[0].mxu0
      %v824 = vadd.f32 0.0, %v823
      %v825 = vpop.f32.mrb[0].mxu0
      %826 = vmatprep.mubr.f32.mxu0 0.0
      %827 = vmatmul.mubr.f32.gmra.mrb[0].mxu0 %v665
      %v828 = vpop.f32.mrb[0].mxu0
      %v829 = vadd.f32 0.0, %v828
      %v830 = vpop.f32.mrb[0].mxu0
      %831 = vmatprep.mubr.f32.mxu0 0.0
      %832 = vmatmul.mubr.f32.gmra.mrb[0].mxu0 %v668
      %v833 = vpop.f32.mrb[0].mxu0
      %v834 = vadd.f32 0.0, %v833
      %v835 = vpop.f32.mrb[0].mxu0
      %836 = vmatprep.mubr.f32.mxu0 0.0
      %837 = vmatmul.mubr.f32.gmra.mrb[0].mxu0 %v671
      %v838 = vpop.f32.mrb[0].mxu0
      %v839 = vadd.f32 0.0, %v838
      %v840 = vpop.f32.mrb[0].mxu0
      %841 = vmatprep.mubr.f32.mxu0 0.0
      %842 = vmatmul.mubr.f32.gmra.mrb[0].mxu0 %v674
      %v843 = vpop.f32.mrb[0].mxu0
      %v844 = vadd.f32 0.0, %v843
      %v845 = vpop.f32.mrb[0].mxu0
      %846 = vmatprep.mubr.f32.mxu0 0.0
      %847 = vmatmul.mubr.f32.gmra.mrb[0].mxu0 %v677
      %v848 = vpop.f32.mrb[0].mxu0
      %v849 = vadd.f32 0.0, %v848
      %v850 = vpop.f32.mrb[0].mxu0
      %851 = vmatprep.mubr.f32.mxu0 0.0
      %852 = vmatmul.mubr.f32.gmra.mrb[0].mxu0 %v680
      %v853 = vpop.f32.mrb[0].mxu0
      %v854 = vadd.f32 0.0, %v853
      %v855 = vpop.f32.mrb[0].mxu0
      %856 = vmatprep.mubr.f32.mxu0 0.0
      %857 = vmatmul.mubr.f32.gmra.mrb[0].mxu0 %v683
      %v858 = vpop.f32.mrb[0].mxu0
      %v859 = vadd.f32 0.0, %v858
      %v860 = vpop.f32.mrb[0].mxu0
      %861 = vmatprep.mubr.f32.mxu0 0.0
      %862 = vmatmul.mubr.f32.gmra.mrb[0].mxu0 %v686
      %v863 = vpop.f32.mrb[0].mxu0
      %v864 = vadd.f32 0.0, %v863
      %v865 = vpop.f32.mrb[0].mxu0
      %866 = vmatprep.mubr.f32.mxu0 0.0
      %867 = vmatmul.mubr.f32.gmra.mrb[0].mxu0 %v689
      %v868 = vpop.f32.mrb[0].mxu0
      %v869 = vadd.f32 0.0, %v868
      %v870 = vpop.f32.mrb[0].mxu0
      %871 = vmatprep.mubr.f32.mxu0 0.0
      %872 = vmatmul.mubr.f32.gmra.mrb[0].mxu0 %v692
      %v873 = vpop.f32.mrb[0].mxu0
      %v874 = vadd.f32 0.0, %v873
      %v875 = vpop.f32.mrb[0].mxu0
      %876 = vmatprep.mubr.f32.mxu0 0.0
      %877 = vmatmul.mubr.f32.gmra.mrb[0].mxu0 %v695
      %v878 = vpop.f32.mrb[0].mxu0
      %v879 = vadd.f32 0.0, %v878
      %v880 = vpop.f32.mrb[0].mxu0
      %881 = vmatprep.mubr.f32.mxu0 0.0
      %882 = vmatmul.mubr.f32.gmra.mrb[0].mxu0 %v698
      %v883 = vpop.f32.mrb[0].mxu0
      %v884 = vadd.f32 0.0, %v883
      %v885 = vpop.f32.mrb[0].mxu0
      %886 = vmatprep.mubr.f32.mxu0 0.0
      %887 = vmatmul.mubr.f32.gmra.mrb[0].mxu0 %v701
      %v888 = vpop.f32.mrb[0].mxu0
      %v889 = vadd.f32 0.0, %v888
      %v890 = vpop.f32.mrb[0].mxu0
      %891 = vmatprep.mubr.f32.mxu0 0.0
      %892 = vmatmul.mubr.f32.gmra.mrb[0].mxu0 %v704
      %v893 = vpop.f32.mrb[0].mxu0
      %v894 = vadd.f32 0.0, %v893
      %v895 = vpop.f32.mrb[0].mxu0
      %896 = vmatprep.mubr.f32.mxu0 0.0
      %897 = vmatmul.mubr.f32.gmra.mrb[0].mxu0 %v707
      %v898 = vpop.f32.mrb[0].mxu0
      %v899 = vadd.f32 0.0, %v898
      %v900 = vpop.f32.mrb[0].mxu0
      %901 = vmatprep.mubr.f32.mxu0 0.0
      %902 = vmatmul.mubr.f32.gmra.mrb[0].mxu0 %v710
      %v903 = vpop.f32.mrb[0].mxu0
      %v904 = vadd.f32 0.0, %v903
      %v905 = vpop.f32.mrb[0].mxu0
      %906 = vmatprep.mubr.f32.mxu0 0.0
      %907 = vmatmul.mubr.f32.gmra.mrb[0].mxu0 %v713
      %v908 = vpop.f32.mrb[0].mxu0
      %v909 = vadd.f32 0.0, %v908
      %v910 = vpop.f32.mrb[0].mxu0
      %911 = vmatprep.mubr.f32.mxu0 0.0
      %912 = vmatmul.mubr.f32.gmra.mrb[0].mxu0 %v716
      %v913 = vpop.f32.mrb[0].mxu0
      %v914 = vadd.f32 0.0, %v913
      %v915 = vpop.f32.mrb[0].mxu0
      %916 = vmatprep.mubr.f32.mxu0 0.0
      %917 = vmatmul.mubr.f32.gmra.mrb[0].mxu0 %v719
      %v918 = vpop.f32.mrb[0].mxu0
      %v919 = vadd.f32 0.0, %v918
      %v920 = vpop.f32.mrb[0].mxu0
      %921 = vmatprep.mubr.f32.mxu0 0.0
      %922 = vmatmul.mubr.f32.gmra.mrb[0].mxu0 %v722
      %v923 = vpop.f32.mrb[0].mxu0
      %v924 = vadd.f32 0.0, %v923
      %v925 = vpop.f32.mrb[0].mxu0
      %926 = vmatprep.mubr.f32.mxu0 0.0
      %927 = vmatmul.mubr.f32.gmra.mrb[0].mxu0 %v725
      %v928 = vpop.f32.mrb[0].mxu0
      %v929 = vadd.f32 0.0, %v928
      %v930 = vpop.f32.mrb[0].mxu0
      %931 = vdwg.mxu0
      %v932 = vld [vmem:[%s3] sm:$0xff]
      %v933 = vld [vmem:[%s3 + $0x8] sm:$0xff]
      %934 = vmatprep.subr.mxu0 0.0
      %935 = vmatpush1.msra.mxu0 %v932
      %936 = vmatprep.subr.mxu0 0.0
      %937 = vmatpush1.msra.mxu0 %v933
      %938 = vmatprep.subr.mxu0 0.0
      %939 = vmatpush1.msra.mxu0 0.0
      %940 = vmatprep.subr.mxu0 0.0
      %941 = vmatpush1.msra.mxu0 0.0
      %942 = vmatprep.subr.mxu0 0.0
      %943 = vmatpush1.msra.mxu0 0.0
      %944 = vmatprep.subr.mxu0 0.0
      %945 = vmatpush1.msra.mxu0 0.0
      %946 = vmatprep.subr.mxu0 0.0
      %947 = vmatpush1.msra.mxu0 0.0
      %948 = vmatprep.subr.mxu0 0.0
      %949 = vmatpush1.msra.mxu0 0.0
      %950 = vmatprep.subr.mxu0 0.0
      %951 = vmatpush1.msra.mxu0 0.0
      %952 = vmatprep.subr.mxu0 0.0
      %953 = vmatpush1.msra.mxu0 0.0
      %954 = vmatprep.subr.mxu0 0.0
      %955 = vmatpush1.msra.mxu0 0.0
      %956 = vmatprep.subr.mxu0 0.0
      %957 = vmatpush1.msra.mxu0 0.0
      %958 = vmatprep.subr.mxu0 0.0
      %959 = vmatpush1.msra.mxu0 0.0
      %960 = vmatprep.subr.mxu0 0.0
      %961 = vmatpush1.msra.mxu0 0.0
      %962 = vmatprep.subr.mxu0 0.0
      %963 = vmatpush1.msra.mxu0 0.0
      %964 = vmatprep.subr.mxu0 0.0
      %965 = vmatpush1.msra.mxu0 0.0
      %966 = vmatprep.subr.mxu0 0.0
      %967 = vmatpush1.msra.mxu0 0.0
      %968 = vmatprep.subr.mxu0 0.0
      %969 = vmatpush1.msra.mxu0 0.0
      %970 = vmatprep.subr.mxu0 0.0
      %971 = vmatpush1.msra.mxu0 0.0
      %972 = vmatprep.subr.mxu0 0.0
      %973 = vmatpush1.msra.mxu0 0.0
      %974 = vmatprep.subr.mxu0 0.0
      %975 = vmatpush1.msra.mxu0 0.0
      %976 = vmatprep.subr.mxu0 0.0
      %977 = vmatpush1.msra.mxu0 0.0
      %978 = vmatprep.subr.mxu0 0.0
      %979 = vmatpush1.msra.mxu0 0.0
      %980 = vmatprep.subr.mxu0 0.0
      %981 = vmatpush1.msra.mxu0 0.0
      %982 = vmatprep.subr.mxu0 0.0
      %983 = vmatpush1.msra.mxu0 0.0
      %984 = vmatprep.subr.mxu0 0.0
      %985 = vmatpush1.msra.mxu0 0.0
      %986 = vmatprep.subr.mxu0 0.0
      %987 = vmatpush1.msra.mxu0 0.0
      %988 = vmatprep.subr.mxu0 0.0
      %989 = vmatpush1.msra.mxu0 0.0
      %990 = vmatprep.subr.mxu0 0.0
      %991 = vmatpush1.msra.mxu0 0.0
      %992 = vmatprep.subr.mxu0 0.0
      %993 = vmatpush1.msra.mxu0 0.0
      %994 = vmatprep.subr.mxu0 0.0
      %995 = vmatpush1.msra.mxu0 0.0
      %996 = vmatprep.subr.mxu0 0.0
      %997 = vmatpush1.msra.mxu0 0.0
      %998 = vmatprep.mubr.f32.mxu0 0.0
      %999 = vmatmul.mubr.f32.gmra.mrb[0].mxu0 %v644
      %v1000 = vpop.f32.mrb[0].mxu0
      %v1001 = vadd.f32 0.0, %v1000
      %v1002 = vpop.f32.mrb[0].mxu0
      %1003 = vmatprep.mubr.f32.mxu0 0.0
      %1004 = vmatmul.mubr.f32.gmra.mrb[0].mxu0 %v647
      %v1005 = vpop.f32.mrb[0].mxu0
      %v1006 = vadd.f32 0.0, %v1005
      %v1007 = vpop.f32.mrb[0].mxu0
      %1008 = vmatprep.mubr.f32.mxu0 0.0
      %1009 = vmatmul.mubr.f32.gmra.mrb[0].mxu0 %v650
      %v1010 = vpop.f32.mrb[0].mxu0
      %v1011 = vadd.f32 0.0, %v1010
      %v1012 = vpop.f32.mrb[0].mxu0
      %1013 = vmatprep.mubr.f32.mxu0 0.0
      %1014 = vmatmul.mubr.f32.gmra.mrb[0].mxu0 %v653
      %v1015 = vpop.f32.mrb[0].mxu0
      %v1016 = vadd.f32 0.0, %v1015
      %v1017 = vpop.f32.mrb[0].mxu0
      %1018 = vmatprep.mubr.f32.mxu0 0.0
      %1019 = vmatmul.mubr.f32.gmra.mrb[0].mxu0 %v656
      %v1020 = vpop.f32.mrb[0].mxu0
      %v1021 = vadd.f32 0.0, %v1020
      %v1022 = vpop.f32.mrb[0].mxu0
      %1023 = vmatprep.mubr.f32.mxu0 0.0
      %1024 = vmatmul.mubr.f32.gmra.mrb[0].mxu0 %v659
      %v1025 = vpop.f32.mrb[0].mxu0
      %v1026 = vadd.f32 0.0, %v1025
      %v1027 = vpop.f32.mrb[0].mxu0
      %1028 = vmatprep.mubr.f32.mxu0 0.0
      %1029 = vmatmul.mubr.f32.gmra.mrb[0].mxu0 %v662
      %v1030 = vpop.f32.mrb[0].mxu0
      %v1031 = vadd.f32 0.0, %v1030
      %v1032 = vpop.f32.mrb[0].mxu0
      %1033 = vmatprep.mubr.f32.mxu0 0.0
      %1034 = vmatmul.mubr.f32.gmra.mrb[0].mxu0 %v665
      %v1035 = vpop.f32.mrb[0].mxu0
      %v1036 = vadd.f32 0.0, %v1035
      %v1037 = vpop.f32.mrb[0].mxu0
      %1038 = vmatprep.mubr.f32.mxu0 0.0
      %1039 = vmatmul.mubr.f32.gmra.mrb[0].mxu0 %v668
      %v1040 = vpop.f32.mrb[0].mxu0
      %v1041 = vadd.f32 0.0, %v1040
      %v1042 = vpop.f32.mrb[0].mxu0
      %1043 = vmatprep.mubr.f32.mxu0 0.0
      %1044 = vmatmul.mubr.f32.gmra.mrb[0].mxu0 %v671
      %v1045 = vpop.f32.mrb[0].mxu0
      %v1046 = vadd.f32 0.0, %v1045
      %v1047 = vpop.f32.mrb[0].mxu0
      %1048 = vmatprep.mubr.f32.mxu0 0.0
      %1049 = vmatmul.mubr.f32.gmra.mrb[0].mxu0 %v674
      %v1050 = vpop.f32.mrb[0].mxu0
      %v1051 = vadd.f32 0.0, %v1050
      %v1052 = vpop.f32.mrb[0].mxu0
      %1053 = vmatprep.mubr.f32.mxu0 0.0
      %1054 = vmatmul.mubr.f32.gmra.mrb[0].mxu0 %v677
      %v1055 = vpop.f32.mrb[0].mxu0
      %v1056 = vadd.f32 0.0, %v1055
      %v1057 = vpop.f32.mrb[0].mxu0
      %1058 = vmatprep.mubr.f32.mxu0 0.0
      %1059 = vmatmul.mubr.f32.gmra.mrb[0].mxu0 %v680
      %v1060 = vpop.f32.mrb[0].mxu0
      %v1061 = vadd.f32 0.0, %v1060
      %v1062 = vpop.f32.mrb[0].mxu0
      %1063 = vmatprep.mubr.f32.mxu0 0.0
      %1064 = vmatmul.mubr.f32.gmra.mrb[0].mxu0 %v683
      %v1065 = vpop.f32.mrb[0].mxu0
      %v1066 = vadd.f32 0.0, %v1065
      %v1067 = vpop.f32.mrb[0].mxu0
      %1068 = vmatprep.mubr.f32.mxu0 0.0
      %1069 = vmatmul.mubr.f32.gmra.mrb[0].mxu0 %v686
      %v1070 = vpop.f32.mrb[0].mxu0
      %v1071 = vadd.f32 0.0, %v1070
      %v1072 = vpop.f32.mrb[0].mxu0
      %1073 = vmatprep.mubr.f32.mxu0 0.0
      %1074 = vmatmul.mubr.f32.gmra.mrb[0].mxu0 %v689
      %v1075 = vpop.f32.mrb[0].mxu0
      %v1076 = vadd.f32 0.0, %v1075
      %v1077 = vpop.f32.mrb[0].mxu0
      %1078 = vmatprep.mubr.f32.mxu0 0.0
      %1079 = vmatmul.mubr.f32.gmra.mrb[0].mxu0 %v692
      %v1080 = vpop.f32.mrb[0].mxu0
      %v1081 = vadd.f32 0.0, %v1080
      %v1082 = vpop.f32.mrb[0].mxu0
      %1083 = vmatprep.mubr.f32.mxu0 0.0
      %1084 = vmatmul.mubr.f32.gmra.mrb[0].mxu0 %v695
      %v1085 = vpop.f32.mrb[0].mxu0
      %v1086 = vadd.f32 0.0, %v1085
      %v1087 = vpop.f32.mrb[0].mxu0
      %1088 = vmatprep.mubr.f32.mxu0 0.0
      %1089 = vmatmul.mubr.f32.gmra.mrb[0].mxu0 %v698
      %v1090 = vpop.f32.mrb[0].mxu0
      %v1091 = vadd.f32 0.0, %v1090
      %v1092 = vpop.f32.mrb[0].mxu0
      %1093 = vmatprep.mubr.f32.mxu0 0.0
      %1094 = vmatmul.mubr.f32.gmra.mrb[0].mxu0 %v701
      %v1095 = vpop.f32.mrb[0].mxu0
      %v1096 = vadd.f32 0.0, %v1095
      %v1097 = vpop.f32.mrb[0].mxu0
      %1098 = vmatprep.mubr.f32.mxu0 0.0
      %1099 = vmatmul.mubr.f32.gmra.mrb[0].mxu0 %v704
      %v1100 = vpop.f32.mrb[0].mxu0
      %v1101 = vadd.f32 0.0, %v1100
      %v1102 = vpop.f32.mrb[0].mxu0
      %1103 = vmatprep.mubr.f32.mxu0 0.0
      %1104 = vmatmul.mubr.f32.gmra.mrb[0].mxu0 %v707
      %v1105 = vpop.f32.mrb[0].mxu0
      %v1106 = vadd.f32 0.0, %v1105
      %v1107 = vpop.f32.mrb[0].mxu0
      %1108 = vmatprep.mubr.f32.mxu0 0.0
      %1109 = vmatmul.mubr.f32.gmra.mrb[0].mxu0 %v710
      %v1110 = vpop.f32.mrb[0].mxu0
      %v1111 = vadd.f32 0.0, %v1110
      %v1112 = vpop.f32.mrb[0].mxu0
      %1113 = vmatprep.mubr.f32.mxu0 0.0
      %1114 = vmatmul.mubr.f32.gmra.mrb[0].mxu0 %v713
      %v1115 = vpop.f32.mrb[0].mxu0
      %v1116 = vadd.f32 0.0, %v1115
      %v1117 = vpop.f32.mrb[0].mxu0
      %1118 = vmatprep.mubr.f32.mxu0 0.0
      %1119 = vmatmul.mubr.f32.gmra.mrb[0].mxu0 %v716
      %v1120 = vpop.f32.mrb[0].mxu0
      %v1121 = vadd.f32 0.0, %v1120
      %v1122 = vpop.f32.mrb[0].mxu0
      %1123 = vmatprep.mubr.f32.mxu0 0.0
      %1124 = vmatmul.mubr.f32.gmra.mrb[0].mxu0 %v719
      %v1125 = vpop.f32.mrb[0].mxu0
      %v1126 = vadd.f32 0.0, %v1125
      %v1127 = vpop.f32.mrb[0].mxu0
      %1128 = vmatprep.mubr.f32.mxu0 0.0
      %1129 = vmatmul.mubr.f32.gmra.mrb[0].mxu0 %v722
      %v1130 = vpop.f32.mrb[0].mxu0
      %v1131 = vadd.f32 0.0, %v1130
      %v1132 = vpop.f32.mrb[0].mxu0
      %1133 = vmatprep.mubr.f32.mxu0 0.0
      %1134 = vmatmul.mubr.f32.gmra.mrb[0].mxu0 %v725
      %v1135 = vpop.f32.mrb[0].mxu0
      %v1136 = vadd.f32 0.0, %v1135
      %v1137 = vpop.f32.mrb[0].mxu0
      %1138 = vdwg.mxu0
      %v1139 = vmax.f32 %v794, %v1001
      %v1140 = vmax.f32 %v799, %v1006
      %v1141 = vmax.f32 %v804, %v1011
      %v1142 = vmax.f32 %v809, %v1016
      %v1143 = vmax.f32 %v814, %v1021
      %v1144 = vmax.f32 %v819, %v1026
      %v1145 = vmax.f32 %v824, %v1031
      %v1146 = vmax.f32 %v829, %v1036
      %v1147 = vmax.f32 %v834, %v1041
      %v1148 = vmax.f32 %v839, %v1046
      %v1149 = vmax.f32 %v844, %v1051
      %v1150 = vmax.f32 %v849, %v1056
      %v1151 = vmax.f32 %v854, %v1061
      %v1152 = vmax.f32 %v859, %v1066
      %v1153 = vmax.f32 %v864, %v1071
      %v1154 = vmax.f32 %v869, %v1076
      %v1155 = vmax.f32 %v874, %v1081
      %v1156 = vmax.f32 %v879, %v1086
      %v1157 = vmax.f32 %v884, %v1091
      %v1158 = vmax.f32 %v889, %v1096
      %v1159 = vmax.f32 %v894, %v1101
      %v1160 = vmax.f32 %v899, %v1106
      %v1161 = vmax.f32 %v904, %v1111
      %v1162 = vmax.f32 %v909, %v1116
      %v1163 = vmax.f32 %v914, %v1121
      %v1164 = vmax.f32 %v919, %v1126
      %v1165 = vmax.f32 %v924, %v1131
      %v1166 = vmax.f32 %v929, %v1136
      %v1167 = vmax.f32 %v1139, %v1153
      %v1168 = vmax.f32 %v1140, %v1154
      %v1169 = vmax.f32 %v1141, %v1155
      %v1170 = vmax.f32 %v1142, %v1156
      %v1171 = vmax.f32 %v1143, %v1157
      %v1172 = vmax.f32 %v1144, %v1158
      %v1173 = vmax.f32 %v1145, %v1159
      %v1174 = vmax.f32 %v1146, %v1160
      %v1175 = vmax.f32 %v1147, %v1161
      %v1176 = vmax.f32 %v1148, %v1162
      %v1177 = vmax.f32 %v1149, %v1163
      %v1178 = vmax.f32 %v1150, %v1164
      %v1179 = vmax.f32 %v1151, %v1165
      %v1180 = vmax.f32 %v1152, %v1166
      %v1181 = vld [vmem:[%s275] sm:$0xff]
      %v1182 = vld [vmem:[%s275 + $0x8] sm:$0xff]
      %v1183 = vld [vmem:[%s275 + $0x10] sm:$0xff]
      %v1184 = vld [vmem:[%s275 + $0x18] sm:$0xff]
      %v1185 = vld [vmem:[%s275 + $0x20] sm:$0xff]
      %v1186 = vld [vmem:[%s275 + $0x28] sm:$0xff]
      %v1187 = vld [vmem:[%s275 + $0x30] sm:$0xff]
      %v1188 = vld [vmem:[%s275 + $0x38] sm:$0xff]
      %v1189 = vld [vmem:[%s275 + $0x40] sm:$0xff]
      %v1190 = vld [vmem:[%s275 + $0x48] sm:$0xff]
      %v1191 = vld [vmem:[%s275 + $0x50] sm:$0xff]
      %v1192 = vld [vmem:[%s275 + $0x58] sm:$0xff]
      %v1193 = vld [vmem:[%s275 + $0x60] sm:$0xff]
      %v1194 = vld [vmem:[%s275 + $0x68] sm:$0xff]
      %v1195 = vmul.f32 %v1167, %v1181
      %v1196 = vmul.f32 %v1168, %v1182
      %v1197 = vmul.f32 %v1169, %v1183
      %v1198 = vmul.f32 %v1170, %v1184
      %v1199 = vmul.f32 %v1171, %v1185
      %v1200 = vmul.f32 %v1172, %v1186
      %v1201 = vmul.f32 %v1173, %v1187
      %v1202 = vmul.f32 %v1174, %v1188
      %v1203 = vmul.f32 %v1175, %v1189
      %v1204 = vmul.f32 %v1176, %v1190
      %v1205 = vmul.f32 %v1177, %v1191
      %v1206 = vmul.f32 %v1178, %v1192
      %v1207 = vmul.f32 %v1179, %v1193
      %v1208 = vmul.f32 %v1180, %v1194
      %vm1209 = vcmask 64512
      %v1210 = vsel %vm1209, %v1195, 0.0
      %1211 = vadd.xlane.f32.xlu0 %v1210
      %v1212 = vpop.xlane.xlu0 %1211
      %v1213 = vsel %vm1209, %v1196, 0.0
      %1214 = vadd.xlane.f32.xlu0 %v1213
      %v1215 = vpop.xlane.xlu0 %1214
      %v1216 = vsel %vm1209, %v1197, 0.0
      %1217 = vadd.xlane.f32.xlu0 %v1216
      %v1218 = vpop.xlane.xlu0 %1217
      %v1219 = vsel %vm1209, %v1198, 0.0
      %1220 = vadd.xlane.f32.xlu0 %v1219
      %v1221 = vpop.xlane.xlu0 %1220
      %v1222 = vsel %vm1209, %v1199, 0.0
      %1223 = vadd.xlane.f32.xlu0 %v1222
      %v1224 = vpop.xlane.xlu0 %1223
      %v1225 = vsel %vm1209, %v1200, 0.0
      %1226 = vadd.xlane.f32.xlu0 %v1225
      %v1227 = vpop.xlane.xlu0 %1226
      %v1228 = vsel %vm1209, %v1201, 0.0
      %1229 = vadd.xlane.f32.xlu0 %v1228
      %v1230 = vpop.xlane.xlu0 %1229
      %v1231 = vsel %vm1209, %v1202, 0.0
      %1232 = vadd.xlane.f32.xlu0 %v1231
      %v1233 = vpop.xlane.xlu0 %1232
      %v1234 = vsel %vm1209, %v1203, 0.0
      %1235 = vadd.xlane.f32.xlu0 %v1234
      %v1236 = vpop.xlane.xlu0 %1235
      %v1237 = vsel %vm1209, %v1204, 0.0
      %1238 = vadd.xlane.f32.xlu0 %v1237
      %v1239 = vpop.xlane.xlu0 %1238
      %v1240 = vsel %vm1209, %v1205, 0.0
      %1241 = vadd.xlane.f32.xlu0 %v1240
      %v1242 = vpop.xlane.xlu0 %1241
      %v1243 = vsel %vm1209, %v1206, 0.0
      %1244 = vadd.xlane.f32.xlu0 %v1243
      %v1245 = vpop.xlane.xlu0 %1244
      %v1246 = vsel %vm1209, %v1207, 0.0
      %1247 = vadd.xlane.f32.xlu0 %v1246
      %v1248 = vpop.xlane.xlu0 %1247
      %v1249 = vsel %vm1209, %v1208, 0.0
      %1250 = vadd.xlane.f32.xlu0 %v1249
      %v1251 = vpop.xlane.xlu0 %1250
      %v1252 = vadd.f32 %v1212, %v1215
      %v1253 = vadd.f32 %v1252, %v1218
      %v1254 = vadd.f32 %v1253, %v1221
      %v1255 = vadd.f32 %v1254, %v1224
      %v1256 = vadd.f32 %v1255, %v1227
      %v1257 = vadd.f32 %v1256, %v1230
      %v1258 = vadd.f32 %v1257, %v1233
      %v1259 = vadd.f32 %v1258, %v1236
      %v1260 = vadd.f32 %v1259, %v1239
      %v1261 = vadd.f32 %v1260, %v1242
      %v1262 = vadd.f32 %v1261, %v1245
      %v1263 = vadd.f32 %v1262, %v1248
      %v1264 = vadd.f32 %v1263, %v1251
      %v1265 = vrot.slane %v1264, 4
      %v1266 = vadd.f32 %v1264, %v1265
      %v1267 = vrot.slane %v1266, 2
      %v1268 = vadd.f32 %v1266, %v1267
      %v1269 = vrot.slane %v1268, 1
      %v1270 = vadd.f32 %v1268, %v1269
      %s1271 = scalar_lea.vmem %s275, 112
      %v1272 = vld [vmem:[%s1271] sm:$0xff]
      %v1273 = vld [vmem:[%s1271 + $0x8] sm:$0xff]
      %v1274 = vld [vmem:[%s1271 + $0x10] sm:$0xff]
      %v1275 = vld [vmem:[%s1271 + $0x18] sm:$0xff]
      %v1276 = vld [vmem:[%s1271 + $0x20] sm:$0xff]
      %v1277 = vld [vmem:[%s1271 + $0x28] sm:$0xff]
      %v1278 = vld [vmem:[%s1271 + $0x30] sm:$0xff]
      %v1279 = vld [vmem:[%s1271 + $0x38] sm:$0xff]
      %v1280 = vld [vmem:[%s1271 + $0x40] sm:$0xff]
      %v1281 = vld [vmem:[%s1271 + $0x48] sm:$0xff]
      %v1282 = vld [vmem:[%s1271 + $0x50] sm:$0xff]
      %v1283 = vld [vmem:[%s1271 + $0x58] sm:$0xff]
      %v1284 = vld [vmem:[%s1271 + $0x60] sm:$0xff]
      %v1285 = vld [vmem:[%s1271 + $0x68] sm:$0xff]
      %v1286 = vmul.f32 %v1167, %v1272
      %v1287 = vmul.f32 %v1168, %v1273
      %v1288 = vmul.f32 %v1169, %v1274
      %v1289 = vmul.f32 %v1170, %v1275
      %v1290 = vmul.f32 %v1171, %v1276
      %v1291 = vmul.f32 %v1172, %v1277
      %v1292 = vmul.f32 %v1173, %v1278
      %v1293 = vmul.f32 %v1174, %v1279
      %v1294 = vmul.f32 %v1175, %v1280
      %v1295 = vmul.f32 %v1176, %v1281
      %v1296 = vmul.f32 %v1177, %v1282
      %v1297 = vmul.f32 %v1178, %v1283
      %v1298 = vmul.f32 %v1179, %v1284
      %v1299 = vmul.f32 %v1180, %v1285
      %v1300 = vsel %vm1209, %v1286, 0.0
      %1301 = vadd.xlane.f32.xlu0 %v1300
      %v1302 = vpop.xlane.xlu0 %1301
      %v1303 = vsel %vm1209, %v1287, 0.0
      %1304 = vadd.xlane.f32.xlu0 %v1303
      %v1305 = vpop.xlane.xlu0 %1304
      %v1306 = vsel %vm1209, %v1288, 0.0
      %1307 = vadd.xlane.f32.xlu0 %v1306
      %v1308 = vpop.xlane.xlu0 %1307
      %v1309 = vsel %vm1209, %v1289, 0.0
      %1310 = vadd.xlane.f32.xlu0 %v1309
      %v1311 = vpop.xlane.xlu0 %1310
      %v1312 = vsel %vm1209, %v1290, 0.0
      %1313 = vadd.xlane.f32.xlu0 %v1312
      %v1314 = vpop.xlane.xlu0 %1313
      %v1315 = vsel %vm1209, %v1291, 0.0
      %1316 = vadd.xlane.f32.xlu0 %v1315
      %v1317 = vpop.xlane.xlu0 %1316
      %v1318 = vsel %vm1209, %v1292, 0.0
      %1319 = vadd.xlane.f32.xlu0 %v1318
      %v1320 = vpop.xlane.xlu0 %1319
      %v1321 = vsel %vm1209, %v1293, 0.0
      %1322 = vadd.xlane.f32.xlu0 %v1321
      %v1323 = vpop.xlane.xlu0 %1322
      %v1324 = vsel %vm1209, %v1294, 0.0
      %1325 = vadd.xlane.f32.xlu0 %v1324
      %v1326 = vpop.xlane.xlu0 %1325
      %v1327 = vsel %vm1209, %v1295, 0.0
      %1328 = vadd.xlane.f32.xlu0 %v1327
      %v1329 = vpop.xlane.xlu0 %1328
      %v1330 = vsel %vm1209, %v1296, 0.0
      %1331 = vadd.xlane.f32.xlu0 %v1330
      %v1332 = vpop.xlane.xlu0 %1331
      %v1333 = vsel %vm1209, %v1297, 0.0
      %1334 = vadd.xlane.f32.xlu0 %v1333
      %v1335 = vpop.xlane.xlu0 %1334
      %v1336 = vsel %vm1209, %v1298, 0.0
      %1337 = vadd.xlane.f32.xlu0 %v1336
      %v1338 = vpop.xlane.xlu0 %1337
      %v1339 = vsel %vm1209, %v1299, 0.0
      %1340 = vadd.xlane.f32.xlu0 %v1339
      %v1341 = vpop.xlane.xlu0 %1340
      %v1342 = vadd.f32 %v1302, %v1305
      %v1343 = vadd.f32 %v1342, %v1308
      %v1344 = vadd.f32 %v1343, %v1311
      %v1345 = vadd.f32 %v1344, %v1314
      %v1346 = vadd.f32 %v1345, %v1317
      %v1347 = vadd.f32 %v1346, %v1320
      %v1348 = vadd.f32 %v1347, %v1323
      %v1349 = vadd.f32 %v1348, %v1326
      %v1350 = vadd.f32 %v1349, %v1329
      %v1351 = vadd.f32 %v1350, %v1332
      %v1352 = vadd.f32 %v1351, %v1335
      %v1353 = vadd.f32 %v1352, %v1338
      %v1354 = vadd.f32 %v1353, %v1341
      %v1355 = vrot.slane %v1354, 4
      %v1356 = vadd.f32 %v1354, %v1355
      %v1357 = vrot.slane %v1356, 2
      %v1358 = vadd.f32 %v1356, %v1357
      %v1359 = vrot.slane %v1358, 1
      %v1360 = vadd.f32 %v1358, %v1359
      %s1361 = scalar_lea.vmem %s275, 224
      %v1362 = vld [vmem:[%s1361] sm:$0xff]
      %v1363 = vld [vmem:[%s1361 + $0x8] sm:$0xff]
      %v1364 = vld [vmem:[%s1361 + $0x10] sm:$0xff]
      %v1365 = vld [vmem:[%s1361 + $0x18] sm:$0xff]
      %v1366 = vld [vmem:[%s1361 + $0x20] sm:$0xff]
      %v1367 = vld [vmem:[%s1361 + $0x28] sm:$0xff]
      %v1368 = vld [vmem:[%s1361 + $0x30] sm:$0xff]
      %v1369 = vld [vmem:[%s1361 + $0x38] sm:$0xff]
      %v1370 = vld [vmem:[%s1361 + $0x40] sm:$0xff]
      %v1371 = vld [vmem:[%s1361 + $0x48] sm:$0xff]
      %v1372 = vld [vmem:[%s1361 + $0x50] sm:$0xff]
      %v1373 = vld [vmem:[%s1361 + $0x58] sm:$0xff]
      %v1374 = vld [vmem:[%s1361 + $0x60] sm:$0xff]
      %v1375 = vld [vmem:[%s1361 + $0x68] sm:$0xff]
      %v1376 = vmul.f32 %v1167, %v1362
      %v1377 = vmul.f32 %v1168, %v1363
      %v1378 = vmul.f32 %v1169, %v1364
      %v1379 = vmul.f32 %v1170, %v1365
      %v1380 = vmul.f32 %v1171, %v1366
      %v1381 = vmul.f32 %v1172, %v1367
      %v1382 = vmul.f32 %v1173, %v1368
      %v1383 = vmul.f32 %v1174, %v1369
      %v1384 = vmul.f32 %v1175, %v1370
      %v1385 = vmul.f32 %v1176, %v1371
      %v1386 = vmul.f32 %v1177, %v1372
      %v1387 = vmul.f32 %v1178, %v1373
      %v1388 = vmul.f32 %v1179, %v1374
      %v1389 = vmul.f32 %v1180, %v1375
      %v1390 = vsel %vm1209, %v1376, 0.0
      %1391 = vadd.xlane.f32.xlu0 %v1390
      %v1392 = vpop.xlane.xlu0 %1391
      %v1393 = vsel %vm1209, %v1377, 0.0
      %1394 = vadd.xlane.f32.xlu0 %v1393
      %v1395 = vpop.xlane.xlu0 %1394
      %v1396 = vsel %vm1209, %v1378, 0.0
      %1397 = vadd.xlane.f32.xlu0 %v1396
      %v1398 = vpop.xlane.xlu0 %1397
      %v1399 = vsel %vm1209, %v1379, 0.0
      %1400 = vadd.xlane.f32.xlu0 %v1399
      %v1401 = vpop.xlane.xlu0 %1400
      %v1402 = vsel %vm1209, %v1380, 0.0
      %1403 = vadd.xlane.f32.xlu0 %v1402
      %v1404 = vpop.xlane.xlu0 %1403
      %v1405 = vsel %vm1209, %v1381, 0.0
      %1406 = vadd.xlane.f32.xlu0 %v1405
      %v1407 = vpop.xlane.xlu0 %1406
      %v1408 = vsel %vm1209, %v1382, 0.0
      %1409 = vadd.xlane.f32.xlu0 %v1408
      %v1410 = vpop.xlane.xlu0 %1409
      %v1411 = vsel %vm1209, %v1383, 0.0
      %1412 = vadd.xlane.f32.xlu0 %v1411
      %v1413 = vpop.xlane.xlu0 %1412
      %v1414 = vsel %vm1209, %v1384, 0.0
      %1415 = vadd.xlane.f32.xlu0 %v1414
      %v1416 = vpop.xlane.xlu0 %1415
      %v1417 = vsel %vm1209, %v1385, 0.0
      %1418 = vadd.xlane.f32.xlu0 %v1417
      %v1419 = vpop.xlane.xlu0 %1418
      %v1420 = vsel %vm1209, %v1386, 0.0
      %1421 = vadd.xlane.f32.xlu0 %v1420
      %v1422 = vpop.xlane.xlu0 %1421
      %v1423 = vsel %vm1209, %v1387, 0.0
      %1424 = vadd.xlane.f32.xlu0 %v1423
      %v1425 = vpop.xlane.xlu0 %1424
      %v1426 = vsel %vm1209, %v1388, 0.0
      %1427 = vadd.xlane.f32.xlu0 %v1426
      %v1428 = vpop.xlane.xlu0 %1427
      %v1429 = vsel %vm1209, %v1389, 0.0
      %1430 = vadd.xlane.f32.xlu0 %v1429
      %v1431 = vpop.xlane.xlu0 %1430
      %v1432 = vadd.f32 %v1392, %v1395
      %v1433 = vadd.f32 %v1432, %v1398
      %v1434 = vadd.f32 %v1433, %v1401
      %v1435 = vadd.f32 %v1434, %v1404
      %v1436 = vadd.f32 %v1435, %v1407
      %v1437 = vadd.f32 %v1436, %v1410
      %v1438 = vadd.f32 %v1437, %v1413
      %v1439 = vadd.f32 %v1438, %v1416
      %v1440 = vadd.f32 %v1439, %v1419
      %v1441 = vadd.f32 %v1440, %v1422
      %v1442 = vadd.f32 %v1441, %v1425
      %v1443 = vadd.f32 %v1442, %v1428
      %v1444 = vadd.f32 %v1443, %v1431
      %v1445 = vrot.slane %v1444, 4
      %v1446 = vadd.f32 %v1444, %v1445
      %v1447 = vrot.slane %v1446, 2
      %v1448 = vadd.f32 %v1446, %v1447
      %v1449 = vrot.slane %v1448, 1
      %v1450 = vadd.f32 %v1448, %v1449
      %s1451 = scalar_lea.vmem %s275, 336
      %v1452 = vld [vmem:[%s1451] sm:$0xff]
      %v1453 = vld [vmem:[%s1451 + $0x8] sm:$0xff]
      %v1454 = vld [vmem:[%s1451 + $0x10] sm:$0xff]
      %v1455 = vld [vmem:[%s1451 + $0x18] sm:$0xff]
      %v1456 = vld [vmem:[%s1451 + $0x20] sm:$0xff]
      %v1457 = vld [vmem:[%s1451 + $0x28] sm:$0xff]
      %v1458 = vld [vmem:[%s1451 + $0x30] sm:$0xff]
      %v1459 = vld [vmem:[%s1451 + $0x38] sm:$0xff]
      %v1460 = vld [vmem:[%s1451 + $0x40] sm:$0xff]
      %v1461 = vld [vmem:[%s1451 + $0x48] sm:$0xff]
      %v1462 = vld [vmem:[%s1451 + $0x50] sm:$0xff]
      %v1463 = vld [vmem:[%s1451 + $0x58] sm:$0xff]
      %v1464 = vld [vmem:[%s1451 + $0x60] sm:$0xff]
      %v1465 = vld [vmem:[%s1451 + $0x68] sm:$0xff]
      %v1466 = vmul.f32 %v1167, %v1452
      %v1467 = vmul.f32 %v1168, %v1453
      %v1468 = vmul.f32 %v1169, %v1454
      %v1469 = vmul.f32 %v1170, %v1455
      %v1470 = vmul.f32 %v1171, %v1456
      %v1471 = vmul.f32 %v1172, %v1457
      %v1472 = vmul.f32 %v1173, %v1458
      %v1473 = vmul.f32 %v1174, %v1459
      %v1474 = vmul.f32 %v1175, %v1460
      %v1475 = vmul.f32 %v1176, %v1461
      %v1476 = vmul.f32 %v1177, %v1462
      %v1477 = vmul.f32 %v1178, %v1463
      %v1478 = vmul.f32 %v1179, %v1464
      %v1479 = vmul.f32 %v1180, %v1465
      %v1480 = vsel %vm1209, %v1466, 0.0
      %1481 = vadd.xlane.f32.xlu0 %v1480
      %v1482 = vpop.xlane.xlu0 %1481
      %v1483 = vsel %vm1209, %v1467, 0.0
      %1484 = vadd.xlane.f32.xlu0 %v1483
      %v1485 = vpop.xlane.xlu0 %1484
      %v1486 = vsel %vm1209, %v1468, 0.0
      %1487 = vadd.xlane.f32.xlu0 %v1486
      %v1488 = vpop.xlane.xlu0 %1487
      %v1489 = vsel %vm1209, %v1469, 0.0
      %1490 = vadd.xlane.f32.xlu0 %v1489
      %v1491 = vpop.xlane.xlu0 %1490
      %v1492 = vsel %vm1209, %v1470, 0.0
      %1493 = vadd.xlane.f32.xlu0 %v1492
      %v1494 = vpop.xlane.xlu0 %1493
      %v1495 = vsel %vm1209, %v1471, 0.0
      %1496 = vadd.xlane.f32.xlu0 %v1495
      %v1497 = vpop.xlane.xlu0 %1496
      %v1498 = vsel %vm1209, %v1472, 0.0
      %1499 = vadd.xlane.f32.xlu0 %v1498
      %v1500 = vpop.xlane.xlu0 %1499
      %v1501 = vsel %vm1209, %v1473, 0.0
      %1502 = vadd.xlane.f32.xlu0 %v1501
      %v1503 = vpop.xlane.xlu0 %1502
      %v1504 = vsel %vm1209, %v1474, 0.0
      %1505 = vadd.xlane.f32.xlu0 %v1504
      %v1506 = vpop.xlane.xlu0 %1505
      %v1507 = vsel %vm1209, %v1475, 0.0
      %1508 = vadd.xlane.f32.xlu0 %v1507
      %v1509 = vpop.xlane.xlu0 %1508
      %v1510 = vsel %vm1209, %v1476, 0.0
      %1511 = vadd.xlane.f32.xlu0 %v1510
      %v1512 = vpop.xlane.xlu0 %1511
      %v1513 = vsel %vm1209, %v1477, 0.0
      %1514 = vadd.xlane.f32.xlu0 %v1513
      %v1515 = vpop.xlane.xlu0 %1514
      %v1516 = vsel %vm1209, %v1478, 0.0
      %1517 = vadd.xlane.f32.xlu0 %v1516
      %v1518 = vpop.xlane.xlu0 %1517
      %v1519 = vsel %vm1209, %v1479, 0.0
      %1520 = vadd.xlane.f32.xlu0 %v1519
      %v1521 = vpop.xlane.xlu0 %1520
      %v1522 = vadd.f32 %v1482, %v1485
      %v1523 = vadd.f32 %v1522, %v1488
      %v1524 = vadd.f32 %v1523, %v1491
      %v1525 = vadd.f32 %v1524, %v1494
      %v1526 = vadd.f32 %v1525, %v1497
      %v1527 = vadd.f32 %v1526, %v1500
      %v1528 = vadd.f32 %v1527, %v1503
      %v1529 = vadd.f32 %v1528, %v1506
      %v1530 = vadd.f32 %v1529, %v1509
      %v1531 = vadd.f32 %v1530, %v1512
      %v1532 = vadd.f32 %v1531, %v1515
      %v1533 = vadd.f32 %v1532, %v1518
      %v1534 = vadd.f32 %v1533, %v1521
      %v1535 = vrot.slane %v1534, 4
      %v1536 = vadd.f32 %v1534, %v1535
      %v1537 = vrot.slane %v1536, 2
      %v1538 = vadd.f32 %v1536, %v1537
      %v1539 = vrot.slane %v1538, 1
      %v1540 = vadd.f32 %v1538, %v1539
      %s1541 = scalar_lea.vmem %s275, 448
      %v1542 = vld [vmem:[%s1541] sm:$0xff]
      %v1543 = vld [vmem:[%s1541 + $0x8] sm:$0xff]
      %v1544 = vld [vmem:[%s1541 + $0x10] sm:$0xff]
      %v1545 = vld [vmem:[%s1541 + $0x18] sm:$0xff]
      %v1546 = vld [vmem:[%s1541 + $0x20] sm:$0xff]
      %v1547 = vld [vmem:[%s1541 + $0x28] sm:$0xff]
      %v1548 = vld [vmem:[%s1541 + $0x30] sm:$0xff]
      %v1549 = vld [vmem:[%s1541 + $0x38] sm:$0xff]
      %v1550 = vld [vmem:[%s1541 + $0x40] sm:$0xff]
      %v1551 = vld [vmem:[%s1541 + $0x48] sm:$0xff]
      %v1552 = vld [vmem:[%s1541 + $0x50] sm:$0xff]
      %v1553 = vld [vmem:[%s1541 + $0x58] sm:$0xff]
      %v1554 = vld [vmem:[%s1541 + $0x60] sm:$0xff]
      %v1555 = vld [vmem:[%s1541 + $0x68] sm:$0xff]
      %v1556 = vmul.f32 %v1167, %v1542
      %v1557 = vmul.f32 %v1168, %v1543
      %v1558 = vmul.f32 %v1169, %v1544
      %v1559 = vmul.f32 %v1170, %v1545
      %v1560 = vmul.f32 %v1171, %v1546
      %v1561 = vmul.f32 %v1172, %v1547
      %v1562 = vmul.f32 %v1173, %v1548
      %v1563 = vmul.f32 %v1174, %v1549
      %v1564 = vmul.f32 %v1175, %v1550
      %v1565 = vmul.f32 %v1176, %v1551
      %v1566 = vmul.f32 %v1177, %v1552
      %v1567 = vmul.f32 %v1178, %v1553
      %v1568 = vmul.f32 %v1179, %v1554
      %v1569 = vmul.f32 %v1180, %v1555
      %v1570 = vsel %vm1209, %v1556, 0.0
      %1571 = vadd.xlane.f32.xlu0 %v1570
      %v1572 = vpop.xlane.xlu0 %1571
      %v1573 = vsel %vm1209, %v1557, 0.0
      %1574 = vadd.xlane.f32.xlu0 %v1573
      %v1575 = vpop.xlane.xlu0 %1574
      %v1576 = vsel %vm1209, %v1558, 0.0
      %1577 = vadd.xlane.f32.xlu0 %v1576
      %v1578 = vpop.xlane.xlu0 %1577
      %v1579 = vsel %vm1209, %v1559, 0.0
      %1580 = vadd.xlane.f32.xlu0 %v1579
      %v1581 = vpop.xlane.xlu0 %1580
      %v1582 = vsel %vm1209, %v1560, 0.0
      %1583 = vadd.xlane.f32.xlu0 %v1582
      %v1584 = vpop.xlane.xlu0 %1583
      %v1585 = vsel %vm1209, %v1561, 0.0
      %1586 = vadd.xlane.f32.xlu0 %v1585
      %v1587 = vpop.xlane.xlu0 %1586
      %v1588 = vsel %vm1209, %v1562, 0.0
      %1589 = vadd.xlane.f32.xlu0 %v1588
      %v1590 = vpop.xlane.xlu0 %1589
      %v1591 = vsel %vm1209, %v1563, 0.0
      %1592 = vadd.xlane.f32.xlu0 %v1591
      %v1593 = vpop.xlane.xlu0 %1592
      %v1594 = vsel %vm1209, %v1564, 0.0
      %1595 = vadd.xlane.f32.xlu0 %v1594
      %v1596 = vpop.xlane.xlu0 %1595
      %v1597 = vsel %vm1209, %v1565, 0.0
      %1598 = vadd.xlane.f32.xlu0 %v1597
      %v1599 = vpop.xlane.xlu0 %1598
      %v1600 = vsel %vm1209, %v1566, 0.0
      %1601 = vadd.xlane.f32.xlu0 %v1600
      %v1602 = vpop.xlane.xlu0 %1601
      %v1603 = vsel %vm1209, %v1567, 0.0
      %1604 = vadd.xlane.f32.xlu0 %v1603
      %v1605 = vpop.xlane.xlu0 %1604
      %v1606 = vsel %vm1209, %v1568, 0.0
      %1607 = vadd.xlane.f32.xlu0 %v1606
      %v1608 = vpop.xlane.xlu0 %1607
      %v1609 = vsel %vm1209, %v1569, 0.0
      %1610 = vadd.xlane.f32.xlu0 %v1609
      %v1611 = vpop.xlane.xlu0 %1610
      %v1612 = vadd.f32 %v1572, %v1575
      %v1613 = vadd.f32 %v1612, %v1578
      %v1614 = vadd.f32 %v1613, %v1581
      %v1615 = vadd.f32 %v1614, %v1584
      %v1616 = vadd.f32 %v1615, %v1587
      %v1617 = vadd.f32 %v1616, %v1590
      %v1618 = vadd.f32 %v1617, %v1593
      %v1619 = vadd.f32 %v1618, %v1596
      %v1620 = vadd.f32 %v1619, %v1599
      %v1621 = vadd.f32 %v1620, %v1602
      %v1622 = vadd.f32 %v1621, %v1605
      %v1623 = vadd.f32 %v1622, %v1608
      %v1624 = vadd.f32 %v1623, %v1611
      %v1625 = vrot.slane %v1624, 4
      %v1626 = vadd.f32 %v1624, %v1625
      %v1627 = vrot.slane %v1626, 2
      %v1628 = vadd.f32 %v1626, %v1627
      %v1629 = vrot.slane %v1628, 1
      %v1630 = vadd.f32 %v1628, %v1629
      %s1631 = scalar_lea.vmem %s275, 560
      %v1632 = vld [vmem:[%s1631] sm:$0xff]
      %v1633 = vld [vmem:[%s1631 + $0x8] sm:$0xff]
      %v1634 = vld [vmem:[%s1631 + $0x10] sm:$0xff]
      %v1635 = vld [vmem:[%s1631 + $0x18] sm:$0xff]
      %v1636 = vld [vmem:[%s1631 + $0x20] sm:$0xff]
      %v1637 = vld [vmem:[%s1631 + $0x28] sm:$0xff]
      %v1638 = vld [vmem:[%s1631 + $0x30] sm:$0xff]
      %v1639 = vld [vmem:[%s1631 + $0x38] sm:$0xff]
      %v1640 = vld [vmem:[%s1631 + $0x40] sm:$0xff]
      %v1641 = vld [vmem:[%s1631 + $0x48] sm:$0xff]
      %v1642 = vld [vmem:[%s1631 + $0x50] sm:$0xff]
      %v1643 = vld [vmem:[%s1631 + $0x58] sm:$0xff]
      %v1644 = vld [vmem:[%s1631 + $0x60] sm:$0xff]
      %v1645 = vld [vmem:[%s1631 + $0x68] sm:$0xff]
      %v1646 = vmul.f32 %v1167, %v1632
      %v1647 = vmul.f32 %v1168, %v1633
      %v1648 = vmul.f32 %v1169, %v1634
      %v1649 = vmul.f32 %v1170, %v1635
      %v1650 = vmul.f32 %v1171, %v1636
      %v1651 = vmul.f32 %v1172, %v1637
      %v1652 = vmul.f32 %v1173, %v1638
      %v1653 = vmul.f32 %v1174, %v1639
      %v1654 = vmul.f32 %v1175, %v1640
      %v1655 = vmul.f32 %v1176, %v1641
      %v1656 = vmul.f32 %v1177, %v1642
      %v1657 = vmul.f32 %v1178, %v1643
      %v1658 = vmul.f32 %v1179, %v1644
      %v1659 = vmul.f32 %v1180, %v1645
      %v1660 = vsel %vm1209, %v1646, 0.0
      %1661 = vadd.xlane.f32.xlu0 %v1660
      %v1662 = vpop.xlane.xlu0 %1661
      %v1663 = vsel %vm1209, %v1647, 0.0
      %1664 = vadd.xlane.f32.xlu0 %v1663
      %v1665 = vpop.xlane.xlu0 %1664
      %v1666 = vsel %vm1209, %v1648, 0.0
      %1667 = vadd.xlane.f32.xlu0 %v1666
      %v1668 = vpop.xlane.xlu0 %1667
      %v1669 = vsel %vm1209, %v1649, 0.0
      %1670 = vadd.xlane.f32.xlu0 %v1669
      %v1671 = vpop.xlane.xlu0 %1670
      %v1672 = vsel %vm1209, %v1650, 0.0
      %1673 = vadd.xlane.f32.xlu0 %v1672
      %v1674 = vpop.xlane.xlu0 %1673
      %v1675 = vsel %vm1209, %v1651, 0.0
      %1676 = vadd.xlane.f32.xlu0 %v1675
      %v1677 = vpop.xlane.xlu0 %1676
      %v1678 = vsel %vm1209, %v1652, 0.0
      %1679 = vadd.xlane.f32.xlu0 %v1678
      %v1680 = vpop.xlane.xlu0 %1679
      %v1681 = vsel %vm1209, %v1653, 0.0
      %1682 = vadd.xlane.f32.xlu0 %v1681
      %v1683 = vpop.xlane.xlu0 %1682
      %v1684 = vsel %vm1209, %v1654, 0.0
      %1685 = vadd.xlane.f32.xlu0 %v1684
      %v1686 = vpop.xlane.xlu0 %1685
      %v1687 = vsel %vm1209, %v1655, 0.0
      %1688 = vadd.xlane.f32.xlu0 %v1687
      %v1689 = vpop.xlane.xlu0 %1688
      %v1690 = vsel %vm1209, %v1656, 0.0
      %1691 = vadd.xlane.f32.xlu0 %v1690
      %v1692 = vpop.xlane.xlu0 %1691
      %v1693 = vsel %vm1209, %v1657, 0.0
      %1694 = vadd.xlane.f32.xlu0 %v1693
      %v1695 = vpop.xlane.xlu0 %1694
      %v1696 = vsel %vm1209, %v1658, 0.0
      %1697 = vadd.xlane.f32.xlu0 %v1696
      %v1698 = vpop.xlane.xlu0 %1697
      %v1699 = vsel %vm1209, %v1659, 0.0
      %1700 = vadd.xlane.f32.xlu0 %v1699
      %v1701 = vpop.xlane.xlu0 %1700
      %v1702 = vadd.f32 %v1662, %v1665
      %v1703 = vadd.f32 %v1702, %v1668
      %v1704 = vadd.f32 %v1703, %v1671
      %v1705 = vadd.f32 %v1704, %v1674
      %v1706 = vadd.f32 %v1705, %v1677
      %v1707 = vadd.f32 %v1706, %v1680
      %v1708 = vadd.f32 %v1707, %v1683
      %v1709 = vadd.f32 %v1708, %v1686
      %v1710 = vadd.f32 %v1709, %v1689
      %v1711 = vadd.f32 %v1710, %v1692
      %v1712 = vadd.f32 %v1711, %v1695
      %v1713 = vadd.f32 %v1712, %v1698
      %v1714 = vadd.f32 %v1713, %v1701
      %v1715 = vrot.slane %v1714, 4
      %v1716 = vadd.f32 %v1714, %v1715
      %v1717 = vrot.slane %v1716, 2
      %v1718 = vadd.f32 %v1716, %v1717
      %v1719 = vrot.slane %v1718, 1
      %v1720 = vadd.f32 %v1718, %v1719
      %s1721 = scalar_lea.vmem %s275, 672
      %v1722 = vld [vmem:[%s1721] sm:$0xff]
      %v1723 = vld [vmem:[%s1721 + $0x8] sm:$0xff]
      %v1724 = vld [vmem:[%s1721 + $0x10] sm:$0xff]
      %v1725 = vld [vmem:[%s1721 + $0x18] sm:$0xff]
      %v1726 = vld [vmem:[%s1721 + $0x20] sm:$0xff]
      %v1727 = vld [vmem:[%s1721 + $0x28] sm:$0xff]
      %v1728 = vld [vmem:[%s1721 + $0x30] sm:$0xff]
      %v1729 = vld [vmem:[%s1721 + $0x38] sm:$0xff]
      %v1730 = vld [vmem:[%s1721 + $0x40] sm:$0xff]
      %v1731 = vld [vmem:[%s1721 + $0x48] sm:$0xff]
      %v1732 = vld [vmem:[%s1721 + $0x50] sm:$0xff]
      %v1733 = vld [vmem:[%s1721 + $0x58] sm:$0xff]
      %v1734 = vld [vmem:[%s1721 + $0x60] sm:$0xff]
      %v1735 = vld [vmem:[%s1721 + $0x68] sm:$0xff]
      %v1736 = vmul.f32 %v1167, %v1722
      %v1737 = vmul.f32 %v1168, %v1723
      %v1738 = vmul.f32 %v1169, %v1724
      %v1739 = vmul.f32 %v1170, %v1725
      %v1740 = vmul.f32 %v1171, %v1726
      %v1741 = vmul.f32 %v1172, %v1727
      %v1742 = vmul.f32 %v1173, %v1728
      %v1743 = vmul.f32 %v1174, %v1729
      %v1744 = vmul.f32 %v1175, %v1730
      %v1745 = vmul.f32 %v1176, %v1731
      %v1746 = vmul.f32 %v1177, %v1732
      %v1747 = vmul.f32 %v1178, %v1733
      %v1748 = vmul.f32 %v1179, %v1734
      %v1749 = vmul.f32 %v1180, %v1735
      %v1750 = vsel %vm1209, %v1736, 0.0
      %1751 = vadd.xlane.f32.xlu0 %v1750
      %v1752 = vpop.xlane.xlu0 %1751
      %v1753 = vsel %vm1209, %v1737, 0.0
      %1754 = vadd.xlane.f32.xlu0 %v1753
      %v1755 = vpop.xlane.xlu0 %1754
      %v1756 = vsel %vm1209, %v1738, 0.0
      %1757 = vadd.xlane.f32.xlu0 %v1756
      %v1758 = vpop.xlane.xlu0 %1757
      %v1759 = vsel %vm1209, %v1739, 0.0
      %1760 = vadd.xlane.f32.xlu0 %v1759
      %v1761 = vpop.xlane.xlu0 %1760
      %v1762 = vsel %vm1209, %v1740, 0.0
      %1763 = vadd.xlane.f32.xlu0 %v1762
      %v1764 = vpop.xlane.xlu0 %1763
      %v1765 = vsel %vm1209, %v1741, 0.0
      %1766 = vadd.xlane.f32.xlu0 %v1765
      %v1767 = vpop.xlane.xlu0 %1766
      %v1768 = vsel %vm1209, %v1742, 0.0
      %1769 = vadd.xlane.f32.xlu0 %v1768
      %v1770 = vpop.xlane.xlu0 %1769
      %v1771 = vsel %vm1209, %v1743, 0.0
      %1772 = vadd.xlane.f32.xlu0 %v1771
      %v1773 = vpop.xlane.xlu0 %1772
      %v1774 = vsel %vm1209, %v1744, 0.0
      %1775 = vadd.xlane.f32.xlu0 %v1774
      %v1776 = vpop.xlane.xlu0 %1775
      %v1777 = vsel %vm1209, %v1745, 0.0
      %1778 = vadd.xlane.f32.xlu0 %v1777
      %v1779 = vpop.xlane.xlu0 %1778
      %v1780 = vsel %vm1209, %v1746, 0.0
      %1781 = vadd.xlane.f32.xlu0 %v1780
      %v1782 = vpop.xlane.xlu0 %1781
      %v1783 = vsel %vm1209, %v1747, 0.0
      %1784 = vadd.xlane.f32.xlu0 %v1783
      %v1785 = vpop.xlane.xlu0 %1784
      %v1786 = vsel %vm1209, %v1748, 0.0
      %1787 = vadd.xlane.f32.xlu0 %v1786
      %v1788 = vpop.xlane.xlu0 %1787
      %v1789 = vsel %vm1209, %v1749, 0.0
      %1790 = vadd.xlane.f32.xlu0 %v1789
      %v1791 = vpop.xlane.xlu0 %1790
      %v1792 = vadd.f32 %v1752, %v1755
      %v1793 = vadd.f32 %v1792, %v1758
      %v1794 = vadd.f32 %v1793, %v1761
      %v1795 = vadd.f32 %v1794, %v1764
      %v1796 = vadd.f32 %v1795, %v1767
      %v1797 = vadd.f32 %v1796, %v1770
      %v1798 = vadd.f32 %v1797, %v1773
      %v1799 = vadd.f32 %v1798, %v1776
      %v1800 = vadd.f32 %v1799, %v1779
      %v1801 = vadd.f32 %v1800, %v1782
      %v1802 = vadd.f32 %v1801, %v1785
      %v1803 = vadd.f32 %v1802, %v1788
      %v1804 = vadd.f32 %v1803, %v1791
      %v1805 = vrot.slane %v1804, 4
      %v1806 = vadd.f32 %v1804, %v1805
      %v1807 = vrot.slane %v1806, 2
      %v1808 = vadd.f32 %v1806, %v1807
      %v1809 = vrot.slane %v1808, 1
      %v1810 = vadd.f32 %v1808, %v1809
      %vm1811 = vcmask 7168
      %v1812 = vsel %vm1811, %v1270, %v1360
      %vm1813 = vcmask 15360
      %v1814 = vsel %vm1813, %v1812, %v1450
      %vm1815 = vcmask 23552
      %v1816 = vsel %vm1815, %v1814, %v1540
      %vm1817 = vcmask 31744
      %v1818 = vsel %vm1817, %v1816, %v1630
      %vm1819 = vcmask 39936
      %v1820 = vsel %vm1819, %v1818, %v1720
      %vm1821 = vcmask 48128
      %v1822 = vsel %vm1821, %v1820, %v1810
      %vm1823 = vcmask 49152
      %1824 = vst.msk [vmem:[%s282] sm:$0x1] %vm1823, %v1822
      %p1825 = scmp.lt.s32.totalorder %s21, 1
      %s1826 = scalar_select %p1825, %s21, 1
      %p1827 = scmp.lt.s32.totalorder %s20, 1
      %s1828 = scalar_select %p1827, %s20, 1
      %s1829 = smul.addr %s1826, 2
      %s1830 = sadd.s32 %s1828, %s1829
      %s1831 = scalar_lea.vmem %s5, %s1830
      // Predicated region
      $region41: #{emotion_model_forward.1} parent=39 // pred_check
        %p1832 = pneg %p168
      $region42: #{emotion_model_forward.1} parent=39 // pred_check_branch
        %1834 = sbr.rel (%p1832) target = $region44
      $region43: #{emotion_model_forward.1} parent=39 // pred_region
        _
      $region44: #{emotion_model_forward.1} parent=39 // pred_fallthru
        _
    $region40: #{emotion_model_forward.1} parent=5 // pred_fallthru
      _
    %p1835 = scmp.le.s32.totalorder 2, %s11
    // Predicated region
    $region45: #{emotion_model_forward.1} parent=5 // pred_check
      %p1836 = pneg %p1835
    $region46: #{emotion_model_forward.1} parent=5 // pred_check_branch
      %1838 = sbr.rel (%p1836) target = $region48
    $region47: #{emotion_model_forward.1} parent=5 // pred_region
      %s1839 = ssub.s32 %s11, 2
      // Predicated region
      $region49: #{emotion_model_forward.1} parent=47 // pred_check
        %p1840 = pneg %p174
      $region50: #{emotion_model_forward.1} parent=47 // pred_check_branch
        %1842 = sbr.rel (%p1840) target = $region52
      $region51: #{emotion_model_forward.1} parent=47 // pred_region
        %p1843 = scmp.lt.s32.totalorder %s23, 1
        %s1844 = scalar_select %p1843, %s23, 1
        %p1845 = scmp.lt.s32.totalorder %s22, 1
        %s1846 = scalar_select %p1845, %s22, 1
        %s1847 = smul.addr %s1844, 2
        %s1848 = sadd.s32 %s1846, %s1847
        %s1849 = scalar_lea.vmem %s5, %s1848
      $region52: #{emotion_model_forward.1} parent=47 // pred_fallthru
        _
    $region48: #{emotion_model_forward.1} parent=5 // pred_fallthru
      _
  $region6: #{emotion_model_forward.1} parent=0 // loop_footer
    %s15 = sadd.s32 1, %s11
  $region7: #{emotion_model_forward.1} parent=0 // loop_footer_branch
    %10 = sbr.rel target = $region3
  $region8: #{emotion_model_forward.1} parent=0 // loop_exit
    _

</llo_original>
